<compile_context>
chip_gen: v6e
topology: v6e:2x2x1
jax: 0.10.0
libtpu: 0.0.40
codegen_flags: <defaults>
</compile_context>

<pallas_src>
import math
import jax
import jax.numpy as jnp
from jax import lax
from jax.experimental import pallas as pl
from jax.experimental.pallas import tpu as pltpu


# ----------------------------- tiled matmul kernel ---------------------------

def _matmul_kernel(x_ref, w_ref, o_ref, acc_ref):
    @pl.when(pl.program_id(2) == 0)
    def _():
        acc_ref[...] = jnp.zeros_like(acc_ref)

    acc_ref[...] += jnp.dot(x_ref[...], w_ref[...],
                            preferred_element_type=jnp.float32)

    @pl.when(pl.program_id(2) == pl.num_programs(2) - 1)
    def _():
        o_ref[...] = acc_ref[...].astype(o_ref.dtype)


def _pick_tile(dim, preferred):
    """Largest convenient tile that divides `dim` (falls back to full dim)."""
    if dim <= preferred:
        return dim
    for t in (preferred, 512, 256, 128):
        if t <= preferred and dim % t == 0:
            return t
    return dim


def pallas_matmul(x, w, *, out_dtype=None, tm=256, tn=256, tk=512):
    M, K = x.shape
    K2, N = w.shape
    assert K == K2
    out_dtype = out_dtype or x.dtype
    tm = _pick_tile(M, tm)
    tn = _pick_tile(N, tn)
    tk = _pick_tile(K, tk)
    grid = (M // tm, N // tn, K // tk)
    return pl.pallas_call(
        _matmul_kernel,
        out_shape=jax.ShapeDtypeStruct((M, N), out_dtype),
        grid=grid,
        in_specs=[
            pl.BlockSpec((tm, tk), lambda i, j, k: (i, k)),
            pl.BlockSpec((tk, tn), lambda i, j, k: (k, j)),
        ],
        out_specs=pl.BlockSpec((tm, tn), lambda i, j, k: (i, j)),
        scratch_shapes=[pltpu.VMEM((tm, tn), jnp.float32)],
        compiler_params=pltpu.CompilerParams(
            dimension_semantics=("parallel", "parallel", "arbitrary")),
    )(x, w)


# --------------------------- flash attention kernel --------------------------

def _make_flash_kernel(n_heads, n_kv_heads, head_dim, q_tile, kv_tile):
    assert q_tile == kv_tile
    n_rep = n_heads // n_kv_heads
    scale = 1.0 / math.sqrt(head_dim)

    def kernel(q_ref, k_ref, v_ref, o_ref, m_sc, l_sc, acc_sc):
        # q_ref : (TQ, Hq*Dh)   k_ref/v_ref : (TK, Hkv*Dh)   o_ref : (TQ, Hq*Dh)
        qi = pl.program_id(1)
        ki = pl.program_id(2)

        @pl.when(ki == 0)
        def _init():
            m_sc[...] = jnp.full_like(m_sc, -jnp.inf)
            l_sc[...] = jnp.zeros_like(l_sc)
            acc_sc[...] = jnp.zeros_like(acc_sc)

        def update(apply_mask):
            q = q_ref[...]
            k = k_ref[...]
            v = v_ref[...]
            if apply_mask:
                row = lax.broadcasted_iota(jnp.int32, (q_tile, kv_tile), 0)
                col = lax.broadcasted_iota(jnp.int32, (q_tile, kv_tile), 1)
            for h in range(n_heads):
                g = h // n_rep                       # GQA group for this head
                qsl = slice(h * head_dim, (h + 1) * head_dim)
                ksl = slice(g * head_dim, (g + 1) * head_dim)
                q_h = q[:, qsl]                      # (TQ, Dh) bf16
                k_g = k[:, ksl]                      # (TK, Dh) bf16
                v_g = v[:, ksl]                      # (TK, Dh) bf16
                # QK^T without an explicit transpose (contract last dims).
                s = lax.dot_general(
                    q_h, k_g, (((1,), (1,)), ((), ())),
                    preferred_element_type=jnp.float32) * scale
                if apply_mask:                       # diagonal tile only
                    s = jnp.where(col > row, jnp.float32(-jnp.inf), s)
                hcol = slice(h, h + 1)
                m_prev = m_sc[:, hcol]               # (TQ, 1)
                m_new = jnp.maximum(m_prev, jnp.max(s, axis=-1, keepdims=True))
                alpha = jnp.exp(m_prev - m_new)
                p = jnp.exp(s - m_new)
                l_sc[:, hcol] = alpha * l_sc[:, hcol] + jnp.sum(
                    p, axis=-1, keepdims=True)
                acc_sc[:, qsl] = alpha * acc_sc[:, qsl] + jnp.dot(
                    p.astype(v_g.dtype), v_g,
                    preferred_element_type=jnp.float32)
                m_sc[:, hcol] = m_new

        @pl.when(ki < qi)                            # fully unmasked kv tile
        def _off_diag():
            update(apply_mask=False)

        @pl.when(ki == qi)                           # diagonal tile + finalize
        def _diag_and_finalize():
            update(apply_mask=True)
            for h in range(n_heads):
                qsl = slice(h * head_dim, (h + 1) * head_dim)
                inv_l = pl.reciprocal(l_sc[:, h:h + 1], approx=True)
                o_ref[:, qsl] = (acc_sc[:, qsl] * inv_l).astype(o_ref.dtype)

        # kv tiles with ki > qi are fully masked: no compute; their K/V blocks
        # are clamped in the index_map so no extra DMA is issued either.

    return kernel


def pallas_flash_attention(q, k, v, n_heads, n_kv_heads, *, tile=None):
    # q: (B, S, Hq*Dh), k/v: (B, S, Hkv*Dh) — lane-dense, no repeat_kv.
    B, S, QD = q.shape
    head_dim = QD // n_heads
    KD = n_kv_heads * head_dim
    assert k.shape == (B, S, KD) and v.shape == (B, S, KD)
    if tile is None:
        # Per-generation tuning: 128-256 on v7x (64 MiB VMEM), up to 512 on
        # v6e/v5e. 128 keeps comfortably under the default scoped VMEM limit.
        tile = 128 if S % 128 == 0 else S
    assert S % tile == 0
    nt = S // tile

    kern = _make_flash_kernel(n_heads, n_kv_heads, head_dim, tile, tile)
    q_spec = pl.BlockSpec((None, tile, QD), lambda b, i, j: (b, i, 0))
    # Clamp the kv block index to the diagonal for pruned (ki > qi) steps so
    # the pipeline re-uses the resident block instead of DMAing masked data.
    kv_spec = pl.BlockSpec((None, tile, KD),
                           lambda b, i, j: (b, jnp.minimum(j, i), 0))
    return pl.pallas_call(
        kern,
        out_shape=jax.ShapeDtypeStruct((B, S, QD), q.dtype),
        grid=(B, nt, nt),
        in_specs=[q_spec, kv_spec, kv_spec],
        out_specs=pl.BlockSpec((None, tile, QD), lambda b, i, j: (b, i, 0)),
        scratch_shapes=[
            pltpu.VMEM((tile, n_heads), jnp.float32),        # m
            pltpu.VMEM((tile, n_heads), jnp.float32),        # l
            pltpu.VMEM((tile, QD), jnp.float32),             # acc (lane-dense)
        ],
        compiler_params=pltpu.CompilerParams(
            dimension_semantics=("parallel", "parallel", "arbitrary")),
    )(q, k, v)


# --------------------------- glue (plain JAX) -------------------------------

def precompute_pos_cis(head_dim, seq_len, theta=1e4):
    freqs = 1.0 / (theta ** (jnp.arange(0, head_dim, 2, dtype=jnp.float32) / head_dim))
    t = jnp.arange(seq_len, dtype=jnp.float32)
    ang = jnp.outer(t, freqs)                     # (S, Dh//2)
    return jnp.cos(ang), jnp.sin(ang)


def apply_rotary_emb(xq, xk, cos, sin):
    # xq: (B, S, Hq, Dh), xk: (B, S, Hkv, Dh); cos/sin: (S, Dh//2). f32 math.
    def rot(x):
        B, S, H, Dh = x.shape
        xr = x.astype(jnp.float32).reshape(B, S, H, Dh // 2, 2)
        c = cos[None, :, None, :]
        s = sin[None, :, None, :]
        real = xr[..., 0] * c - xr[..., 1] * s
        imag = xr[..., 0] * s + xr[..., 1] * c
        out = jnp.stack([real, imag], axis=-1).reshape(B, S, H, Dh)
        return out.astype(x.dtype)

    return rot(xq), rot(xk)


def attention_forward(x, params, cos, sin, n_heads, n_kv_heads,
                      compute_dtype=jnp.bfloat16):
    B, S, D = x.shape
    head_dim = D // n_heads
    q_out = n_heads * head_dim
    kv_out = n_kv_heads * head_dim

    # Fused QKV projection (one tiled matmul, bf16 operands, f32 accumulation).
    x2d = x.reshape(B * S, D).astype(compute_dtype)
    w_qkv = jnp.concatenate(
        [params["wq"], params["wk"], params["wv"]], axis=1).astype(compute_dtype)
    qkv = pallas_matmul(x2d, w_qkv, out_dtype=compute_dtype)   # (B*S, q+2kv)

    xq = qkv[:, :q_out].reshape(B, S, n_heads, head_dim)
    xk = qkv[:, q_out:q_out + kv_out].reshape(B, S, n_kv_heads, head_dim)
    xv = qkv[:, q_out + kv_out:].reshape(B, S, kv_out)          # stays fused

    xq, xk = apply_rotary_emb(xq, xk, cos, sin)                 # f32 math
    xq = xq.reshape(B, S, q_out)                                # lane-dense
    xk = xk.reshape(B, S, kv_out)

    # Flash attention: causal, GQA inside the kernel, no transposes/repeat_kv.
    attn = pallas_flash_attention(xq, xk, xv, n_heads, n_kv_heads)

    out = pallas_matmul(attn.reshape(B * S, q_out),
                        params["wo"].astype(compute_dtype),
                        out_dtype=jnp.float32)
    return out.reshape(B, S, D)


# --------------------------------- main --------------------------------------

if __name__ == "__main__":
    # Small config consistent with the module: dim=64, n_heads=4, n_kv_heads=2
    B, S, D = 2, 8, 64
    n_heads, n_kv_heads = 4, 2
    head_dim = D // n_heads

    key = jax.random.PRNGKey(0)
    kx, kq, kk, kv, ko = jax.random.split(key, 5)

    x = jax.random.normal(kx, (B, S, D), dtype=jnp.float32)
    wscale = 1.0 / math.sqrt(D)
    params = {
        "wq": jax.random.normal(kq, (D, n_heads * head_dim), dtype=jnp.float32) * wscale,
        "wk": jax.random.normal(kk, (D, n_kv_heads * head_dim), dtype=jnp.float32) * wscale,
        "wv": jax.random.normal(kv, (D, n_kv_heads * head_dim), dtype=jnp.float32) * wscale,
        "wo": jax.random.normal(ko, (n_heads * head_dim, D), dtype=jnp.float32) * wscale,
    }
    cos, sin = precompute_pos_cis(head_dim, S)

    fwd = jax.jit(lambda x_, p_: attention_forward(
        x_, p_, cos, sin, n_heads, n_kv_heads))
    out = jax.block_until_ready(fwd(x, params))

    # Pure-JAX f32 reference of the same math (module semantics).
    def ref(x):
        x2d = x.reshape(B * S, D)
        xq = (x2d @ params["wq"]).reshape(B, S, n_heads, head_dim)
        xk = (x2d @ params["wk"]).reshape(B, S, n_kv_heads, head_dim)
        xv = (x2d @ params["wv"]).reshape(B, S, n_kv_heads, head_dim)
        xq, xk = apply_rotary_emb(xq, xk, cos, sin)
        n_rep = n_heads // n_kv_heads
        xk = jnp.repeat(xk, n_rep, axis=2)
        xv = jnp.repeat(xv, n_rep, axis=2)
        q = jnp.transpose(xq, (0, 2, 1, 3))
        k = jnp.transpose(xk, (0, 2, 1, 3))
        v = jnp.transpose(xv, (0, 2, 1, 3))
        s = jnp.einsum("bhqd,bhkd->bhqk", q, k) / math.sqrt(head_dim)
        mask = jnp.triu(jnp.full((S, S), -jnp.inf), k=1)
        s = s + mask[None, None]
        p = jax.nn.softmax(s, axis=-1)
        o = jnp.einsum("bhqk,bhkd->bhqd", p, v)
        o = jnp.transpose(o, (0, 2, 1, 3)).reshape(B * S, -1)
        return (o @ params["wo"]).reshape(B, S, D)

    r = ref(x)
    # bf16 MXU operands (f32 accumulation) => loosened tolerance vs f32 ref.
    assert jnp.allclose(out, r, atol=3e-2, rtol=3e-2), float(jnp.abs(out - r).max())
    print("KERNEL_OK")
</pallas_src>

<mosaic_0001>
module attributes {stable_mosaic.version = 11 : i64} {
  func.func @_matmul_kernel(%arg0: i32, %arg1: i32, %arg2: i32, %arg3: memref<16x64xbf16, #tpu.memory_space<vmem>>, %arg4: memref<64x128xbf16, #tpu.memory_space<vmem>>, %arg5: memref<16x128xbf16, #tpu.memory_space<vmem>>, %arg6: memref<16x128xf32, #tpu.memory_space<vmem>>) attributes {dimension_semantics = [#tpu.dimension_semantics<parallel>, #tpu.dimension_semantics<parallel>, #tpu.dimension_semantics<arbitrary>], iteration_bounds = array<i64: 1, 1, 1>, scalar_prefetch = 0 : i64, scratch_operands = 1 : i64, tpu.core_type = #tpu.core_type<tc>, window_params = [{transform_indices = @transform_0, window_bounds = array<i64: 16, 64>}, {transform_indices = @transform_1, window_bounds = array<i64: 64, 128>}, {transform_indices = @transform_2, window_bounds = array<i64: 16, 128>}]} {
    %c0_i32 = arith.constant 0 : i32
    %0 = arith.cmpi eq, %arg2, %c0_i32 : i32
    %1 = arith.extui %0 : i1 to i32
    %c0_i32_0 = arith.constant 0 : i32
    %2 = arith.cmpi ne, %1, %c0_i32_0 : i32
    scf.if %2 {
      %cst_10 = arith.constant 0.000000e+00 : f32
      %12 = vector.broadcast %cst_10 : f32 to vector<16x128xf32>
      %c0_11 = arith.constant 0 : index
      %c0_12 = arith.constant 0 : index
      %13 = vector.load %arg6[%c0_11, %c0_12] : memref<16x128xf32, #tpu.memory_space<vmem>>, vector<16x128xf32>
      tpu.vector_store %arg6[%c0_11, %c0_12], %12 {strides = array<i32>} : memref<16x128xf32, #tpu.memory_space<vmem>>, vector<16x128xf32>,
    } else {
    }
    %c0 = arith.constant 0 : index
    %c0_1 = arith.constant 0 : index
    %3 = vector.load %arg6[%c0, %c0_1] : memref<16x128xf32, #tpu.memory_space<vmem>>, vector<16x128xf32>
    %c0_2 = arith.constant 0 : index
    %c0_3 = arith.constant 0 : index
    %4 = vector.load %arg3[%c0_2, %c0_3] : memref<16x64xbf16, #tpu.memory_space<vmem>>, vector<16x64xbf16>
    %c0_4 = arith.constant 0 : index
    %c0_5 = arith.constant 0 : index
    %5 = vector.load %arg4[%c0_4, %c0_5] : memref<64x128xbf16, #tpu.memory_space<vmem>>, vector<64x128xbf16>
    %cst = arith.constant dense<0.000000e+00> : vector<16x128xf32>
    %6 = tpu.matmul %4, %5, %cst {dimension_numbers = #tpu.dot_dimension_numbers<[1], [0], [0], [1], [0, 0, 1, 1], [], []>} : vector<16x64xbf16>, vector<64x128xbf16>, vector<16x128xf32> -> vector<16x128xf32>
    %7 = arith.addf %3, %6 : vector<16x128xf32>
    %c0_6 = arith.constant 0 : index
    %c0_7 = arith.constant 0 : index
    %8 = vector.load %arg6[%c0_6, %c0_7] : memref<16x128xf32, #tpu.memory_space<vmem>>, vector<16x128xf32>
    tpu.vector_store %arg6[%c0_6, %c0_7], %7 {strides = array<i32>} : memref<16x128xf32, #tpu.memory_space<vmem>>, vector<16x128xf32>,
    %c0_i32_8 = arith.constant 0 : i32
    %9 = arith.cmpi eq, %arg2, %c0_i32_8 : i32
    %10 = arith.extui %9 : i1 to i32
    %c0_i32_9 = arith.constant 0 : i32
    %11 = arith.cmpi ne, %10, %c0_i32_9 : i32
    scf.if %11 {
      %c0_10 = arith.constant 0 : index
      %c0_11 = arith.constant 0 : index
      %12 = vector.load %arg6[%c0_10, %c0_11] : memref<16x128xf32, #tpu.memory_space<vmem>>, vector<16x128xf32>
      %13 = arith.truncf %12 : vector<16x128xf32> to vector<16x128xbf16>
      %c0_12 = arith.constant 0 : index
      %c0_13 = arith.constant 0 : index
      %14 = vector.load %arg5[%c0_12, %c0_13] : memref<16x128xbf16, #tpu.memory_space<vmem>>, vector<16x128xbf16>
      tpu.vector_store %arg5[%c0_12, %c0_13], %13 {strides = array<i32>} : memref<16x128xbf16, #tpu.memory_space<vmem>>, vector<16x128xbf16>,
    } else {
    }
    return
  }
  func.func @transform_0(%arg0: i32, %arg1: i32, %arg2: i32) -> (i32, i32) {
    %c0_i32 = arith.constant 0 : i32
    return %arg0, %arg2 : i32, i32
  }
  func.func @transform_1(%arg0: i32, %arg1: i32, %arg2: i32) -> (i32, i32) {
    %c0_i32 = arith.constant 0 : i32
    return %arg2, %arg1 : i32, i32
  }
  func.func @transform_2(%arg0: i32, %arg1: i32, %arg2: i32) -> (i32, i32) {
    %c0_i32 = arith.constant 0 : i32
    return %arg0, %arg1 : i32, i32
  }
}

module attributes {stable_mosaic.version = 11 : i64} {
  func.func @_matmul_kernel(%arg0: i32, %arg1: i32, %arg2: i32, %arg3: memref<16x64xbf16, #tpu.memory_space<vmem>>, %arg4: memref<64x64xbf16, #tpu.memory_space<vmem>>, %arg5: memref<16x64xf32, #tpu.memory_space<vmem>>, %arg6: memref<16x64xf32, #tpu.memory_space<vmem>>) attributes {dimension_semantics = [#tpu.dimension_semantics<parallel>, #tpu.dimension_semantics<parallel>, #tpu.dimension_semantics<arbitrary>], iteration_bounds = array<i64: 1, 1, 1>, scalar_prefetch = 0 : i64, scratch_operands = 1 : i64, tpu.core_type = #tpu.core_type<tc>, window_params = [{transform_indices = @transform_0, window_bounds = array<i64: 16, 64>}, {transform_indices = @transform_1, window_bounds = array<i64: 64, 64>}, {transform_indices = @transform_2, window_bounds = array<i64: 16, 64>}]} {
    %c0_i32 = arith.constant 0 : i32
    %0 = arith.cmpi eq, %arg2, %c0_i32 : i32
    %1 = arith.extui %0 : i1 to i32
    %c0_i32_0 = arith.constant 0 : i32
    %2 = arith.cmpi ne, %1, %c0_i32_0 : i32
    scf.if %2 {
      %cst_10 = arith.constant 0.000000e+00 : f32
      %12 = vector.broadcast %cst_10 : f32 to vector<16x64xf32>
      %c0_11 = arith.constant 0 : index
      %c0_12 = arith.constant 0 : index
      %13 = vector.load %arg6[%c0_11, %c0_12] : memref<16x64xf32, #tpu.memory_space<vmem>>, vector<16x64xf32>
      tpu.vector_store %arg6[%c0_11, %c0_12], %12 {strides = array<i32>} : memref<16x64xf32, #tpu.memory_space<vmem>>, vector<16x64xf32>,
    } else {
    }
    %c0 = arith.constant 0 : index
    %c0_1 = arith.constant 0 : index
    %3 = vector.load %arg6[%c0, %c0_1] : memref<16x64xf32, #tpu.memory_space<vmem>>, vector<16x64xf32>
    %c0_2 = arith.constant 0 : index
    %c0_3 = arith.constant 0 : index
    %4 = vector.load %arg3[%c0_2, %c0_3] : memref<16x64xbf16, #tpu.memory_space<vmem>>, vector<16x64xbf16>
    %c0_4 = arith.constant 0 : index
    %c0_5 = arith.constant 0 : index
    %5 = vector.load %arg4[%c0_4, %c0_5] : memref<64x64xbf16, #tpu.memory_space<vmem>>, vector<64x64xbf16>
    %cst = arith.constant dense<0.000000e+00> : vector<16x64xf32>
    %6 = tpu.matmul %4, %5, %cst {dimension_numbers = #tpu.dot_dimension_numbers<[1], [0], [0], [1], [0, 0, 1, 1], [], []>} : vector<16x64xbf16>, vector<64x64xbf16>, vector<16x64xf32> -> vector<16x64xf32>
    %7 = arith.addf %3, %6 : vector<16x64xf32>
    %c0_6 = arith.constant 0 : index
    %c0_7 = arith.constant 0 : index
    %8 = vector.load %arg6[%c0_6, %c0_7] : memref<16x64xf32, #tpu.memory_space<vmem>>, vector<16x64xf32>
    tpu.vector_store %arg6[%c0_6, %c0_7], %7 {strides = array<i32>} : memref<16x64xf32, #tpu.memory_space<vmem>>, vector<16x64xf32>,
    %c0_i32_8 = arith.constant 0 : i32
    %9 = arith.cmpi eq, %arg2, %c0_i32_8 : i32
    %10 = arith.extui %9 : i1 to i32
    %c0_i32_9 = arith.constant 0 : i32
    %11 = arith.cmpi ne, %10, %c0_i32_9 : i32
    scf.if %11 {
      %c0_10 = arith.constant 0 : index
      %c0_11 = arith.constant 0 : index
      %12 = vector.load %arg6[%c0_10, %c0_11] : memref<16x64xf32, #tpu.memory_space<vmem>>, vector<16x64xf32>
      %c0_12 = arith.constant 0 : index
      %c0_13 = arith.constant 0 : index
      %13 = vector.load %arg5[%c0_12, %c0_13] : memref<16x64xf32, #tpu.memory_space<vmem>>, vector<16x64xf32>
      tpu.vector_store %arg5[%c0_12, %c0_13], %12 {strides = array<i32>} : memref<16x64xf32, #tpu.memory_space<vmem>>, vector<16x64xf32>,
    } else {
    }
    return
  }
  func.func @transform_0(%arg0: i32, %arg1: i32, %arg2: i32) -> (i32, i32) {
    %c0_i32 = arith.constant 0 : i32
    return %arg0, %arg2 : i32, i32
  }
  func.func @transform_1(%arg0: i32, %arg1: i32, %arg2: i32) -> (i32, i32) {
    %c0_i32 = arith.constant 0 : i32
    return %arg2, %arg1 : i32, i32
  }
  func.func @transform_2(%arg0: i32, %arg1: i32, %arg2: i32) -> (i32, i32) {
    %c0_i32 = arith.constant 0 : i32
    return %arg0, %arg1 : i32, i32
  }
}

module attributes {stable_mosaic.version = 11 : i64} {
  func.func @kernel(%arg0: i32, %arg1: i32, %arg2: i32, %arg3: memref<1x8x64xbf16, #tpu.memory_space<vmem>>, %arg4: memref<1x8x32xbf16, #tpu.memory_space<vmem>>, %arg5: memref<1x8x32xbf16, #tpu.memory_space<vmem>>, %arg6: memref<1x8x64xbf16, #tpu.memory_space<vmem>>, %arg7: memref<8x4xf32, #tpu.memory_space<vmem>>, %arg8: memref<8x4xf32, #tpu.memory_space<vmem>>, %arg9: memref<8x64xf32, #tpu.memory_space<vmem>>) attributes {dimension_semantics = [#tpu.dimension_semantics<parallel>, #tpu.dimension_semantics<parallel>, #tpu.dimension_semantics<arbitrary>], iteration_bounds = array<i64: 2, 1, 1>, scalar_prefetch = 0 : i64, scratch_operands = 3 : i64, tpu.core_type = #tpu.core_type<tc>, window_params = [{transform_indices = @transform_0, window_bounds = array<i64: 1, 8, 64>}, {transform_indices = @transform_1, window_bounds = array<i64: 1, 8, 32>}, {transform_indices = @transform_2, window_bounds = array<i64: 1, 8, 32>}, {transform_indices = @transform_3, window_bounds = array<i64: 1, 8, 64>}]} {
    %c0_i32 = arith.constant 0 : i32
    %0 = arith.cmpi eq, %arg2, %c0_i32 : i32
    %1 = arith.extui %0 : i1 to i32
    %c0_i32_0 = arith.constant 0 : i32
    %2 = arith.cmpi ne, %1, %c0_i32_0 : i32
    scf.if %2 {
      %cst = arith.constant 0xFF800000 : f32
      %9 = vector.broadcast %cst : f32 to vector<8x4xf32>
      %c0 = arith.constant 0 : index
      %c0_3 = arith.constant 0 : index
      %10 = vector.load %arg7[%c0, %c0_3] : memref<8x4xf32, #tpu.memory_space<vmem>>, vector<8x4xf32>
      tpu.vector_store %arg7[%c0, %c0_3], %9 {strides = array<i32>} : memref<8x4xf32, #tpu.memory_space<vmem>>, vector<8x4xf32>,
      %cst_4 = arith.constant 0.000000e+00 : f32
      %11 = vector.broadcast %cst_4 : f32 to vector<8x4xf32>
      %c0_5 = arith.constant 0 : index
      %c0_6 = arith.constant 0 : index
      %12 = vector.load %arg8[%c0_5, %c0_6] : memref<8x4xf32, #tpu.memory_space<vmem>>, vector<8x4xf32>
      tpu.vector_store %arg8[%c0_5, %c0_6], %11 {strides = array<i32>} : memref<8x4xf32, #tpu.memory_space<vmem>>, vector<8x4xf32>,
      %cst_7 = arith.constant 0.000000e+00 : f32
      %13 = vector.broadcast %cst_7 : f32 to vector<8x64xf32>
      %c0_8 = arith.constant 0 : index
      %c0_9 = arith.constant 0 : index
      %14 = vector.load %arg9[%c0_8, %c0_9] : memref<8x64xf32, #tpu.memory_space<vmem>>, vector<8x64xf32>
      tpu.vector_store %arg9[%c0_8, %c0_9], %13 {strides = array<i32>} : memref<8x64xf32, #tpu.memory_space<vmem>>, vector<8x64xf32>,
    } else {
    }
    %3 = arith.cmpi slt, %arg2, %arg1 : i32
    %4 = arith.extui %3 : i1 to i32
    %c0_i32_1 = arith.constant 0 : i32
    %5 = arith.cmpi ne, %4, %c0_i32_1 : i32
    scf.if %5 {
      %c0 = arith.constant 0 : index
      %c0_3 = arith.constant 0 : index
      %c0_4 = arith.constant 0 : index
      %9 = vector.load %arg3[%c0, %c0_3, %c0_4] : memref<1x8x64xbf16, #tpu.memory_space<vmem>>, vector<1x8x64xbf16>
      %10 = vector.shape_cast %9 : vector<1x8x64xbf16> to vector<8x64xbf16>
      %c0_5 = arith.constant 0 : index
      %c0_6 = arith.constant 0 : index
      %c0_7 = arith.constant 0 : index
      %11 = vector.load %arg4[%c0_5, %c0_6, %c0_7] : memref<1x8x32xbf16, #tpu.memory_space<vmem>>, vector<1x8x32xbf16>
      %12 = vector.shape_cast %11 : vector<1x8x32xbf16> to vector<8x32xbf16>
      %c0_8 = arith.constant 0 : index
      %c0_9 = arith.constant 0 : index
      %c0_10 = arith.constant 0 : index
      %13 = vector.load %arg5[%c0_8, %c0_9, %c0_10] : memref<1x8x32xbf16, #tpu.memory_space<vmem>>, vector<1x8x32xbf16>
      %14 = vector.shape_cast %13 : vector<1x8x32xbf16> to vector<8x32xbf16>
      %15 = vector.extract_strided_slice %10 {offsets = [0, 0], sizes = [8, 16], strides = [1, 1]} : vector<8x64xbf16> to vector<8x16xbf16>
      %16 = vector.extract_strided_slice %12 {offsets = [0, 0], sizes = [8, 16], strides = [1, 1]} : vector<8x32xbf16> to vector<8x16xbf16>
      %17 = vector.extract_strided_slice %14 {offsets = [0, 0], sizes = [8, 16], strides = [1, 1]} : vector<8x32xbf16> to vector<8x16xbf16>
      %cst = arith.constant dense<0.000000e+00> : vector<8x8xf32>
      %18 = tpu.matmul %15, %16, %cst {dimension_numbers = #tpu.dot_dimension_numbers<[1], [1], [0], [0], [0, 0, 1, 0], [], []>} : vector<8x16xbf16>, vector<8x16xbf16>, vector<8x8xf32> -> vector<8x8xf32>
      %cst_11 = arith.constant 2.500000e-01 : f32
      %19 = vector.broadcast %cst_11 : f32 to vector<8x8xf32>
      %20 = arith.mulf %18, %19 : vector<8x8xf32>
      %c0_12 = arith.constant 0 : index
      %c0_13 = arith.constant 0 : index
      %21 = vector.load %arg7[%c0_12, %c0_13] : memref<8x4xf32, #tpu.memory_space<vmem>>, vector<8x1xf32>
      %cst_14 = arith.constant dense<0xFF800000> : vector<8xf32>
      %22 = vector.multi_reduction <maximumf>, %20, %cst_14 [1] : vector<8x8xf32> to vector<8xf32>
      %23 = vector.shape_cast %22 : vector<8xf32> to vector<8x1xf32>
      %24 = arith.maximumf %21, %23 : vector<8x1xf32>
      %25 = arith.subf %21, %24 : vector<8x1xf32>
      %26 = math.exp %25 : vector<8x1xf32>
      %27 = vector.broadcast %24 : vector<8x1xf32> to vector<8x8xf32>
      %28 = arith.subf %20, %27 : vector<8x8xf32>
      %29 = math.exp %28 : vector<8x8xf32>
      %c0_15 = arith.constant 0 : index
      %c0_16 = arith.constant 0 : index
      %30 = vector.load %arg8[%c0_15, %c0_16] : memref<8x4xf32, #tpu.memory_space<vmem>>, vector<8x1xf32>
      %31 = arith.mulf %26, %30 : vector<8x1xf32>
      %cst_17 = arith.constant dense<0.000000e+00> : vector<8xf32>
      %32 = vector.multi_reduction <add>, %29, %cst_17 [1] : vector<8x8xf32> to vector<8xf32>
      %33 = vector.shape_cast %32 : vector<8xf32> to vector<8x1xf32>
      %34 = arith.addf %31, %33 : vector<8x1xf32>
      %c0_18 = arith.constant 0 : index
      %c0_19 = arith.constant 0 : index
      %35 = vector.load %arg8[%c0_18, %c0_19] : memref<8x4xf32, #tpu.memory_space<vmem>>, vector<8x1xf32>
      tpu.vector_store %arg8[%c0_18, %c0_19], %34 {strides = array<i32>} : memref<8x4xf32, #tpu.memory_space<vmem>>, vector<8x1xf32>,
      %c0_20 = arith.constant 0 : index
      %c0_21 = arith.constant 0 : index
      %36 = vector.load %arg9[%c0_20, %c0_21] : memref<8x64xf32, #tpu.memory_space<vmem>>, vector<8x16xf32>
      %37 = vector.broadcast %26 : vector<8x1xf32> to vector<8x16xf32>
      %38 = arith.mulf %37, %36 : vector<8x16xf32>
      %39 = arith.truncf %29 : vector<8x8xf32> to vector<8x8xbf16>
      %cst_22 = arith.constant dense<0.000000e+00> : vector<8x16xf32>
      %40 = tpu.matmul %39, %17, %cst_22 {dimension_numbers = #tpu.dot_dimension_numbers<[1], [0], [0], [1], [0, 0, 1, 1], [], []>} : vector<8x8xbf16>, vector<8x16xbf16>, vector<8x16xf32> -> vector<8x16xf32>
      %41 = arith.addf %38, %40 : vector<8x16xf32>
      %c0_23 = arith.constant 0 : index
      %c0_24 = arith.constant 0 : index
      %42 = vector.load %arg9[%c0_23, %c0_24] : memref<8x64xf32, #tpu.memory_space<vmem>>, vector<8x16xf32>
      tpu.vector_store %arg9[%c0_23, %c0_24], %41 {strides = array<i32>} : memref<8x64xf32, #tpu.memory_space<vmem>>, vector<8x16xf32>,
      %c0_25 = arith.constant 0 : index
      %c0_26 = arith.constant 0 : index
      %43 = vector.load %arg7[%c0_25, %c0_26] : memref<8x4xf32, #tpu.memory_space<vmem>>, vector<8x1xf32>
      tpu.vector_store %arg7[%c0_25, %c0_26], %24 {strides = array<i32>} : memref<8x4xf32, #tpu.memory_space<vmem>>, vector<8x1xf32>,
      %44 = vector.extract_strided_slice %10 {offsets = [0, 16], sizes = [8, 16], strides = [1, 1]} : vector<8x64xbf16> to vector<8x16xbf16>
      %45 = vector.extract_strided_slice %12 {offsets = [0, 0], sizes = [8, 16], strides = [1, 1]} : vector<8x32xbf16> to vector<8x16xbf16>
      %46 = vector.extract_strided_slice %14 {offsets = [0, 0], sizes = [8, 16], strides = [1, 1]} : vector<8x32xbf16> to vector<8x16xbf16>
      %cst_27 = arith.constant dense<0.000000e+00> : vector<8x8xf32>
      %47 = tpu.matmul %44, %45, %cst_27 {dimension_numbers = #tpu.dot_dimension_numbers<[1], [1], [0], [0], [0, 0, 1, 0], [], []>} : vector<8x16xbf16>, vector<8x16xbf16>, vector<8x8xf32> -> vector<8x8xf32>
      %cst_28 = arith.constant 2.500000e-01 : f32
      %48 = vector.broadcast %cst_28 : f32 to vector<8x8xf32>
      %49 = arith.mulf %47, %48 : vector<8x8xf32>
      %c0_29 = arith.constant 0 : index
      %c1 = arith.constant 1 : index
      %50 = vector.load %arg7[%c0_29, %c1] : memref<8x4xf32, #tpu.memory_space<vmem>>, vector<8x1xf32>
      %cst_30 = arith.constant dense<0xFF800000> : vector<8xf32>
      %51 = vector.multi_reduction <maximumf>, %49, %cst_30 [1] : vector<8x8xf32> to vector<8xf32>
      %52 = vector.shape_cast %51 : vector<8xf32> to vector<8x1xf32>
      %53 = arith.maximumf %50, %52 : vector<8x1xf32>
      %54 = arith.subf %50, %53 : vector<8x1xf32>
      %55 = math.exp %54 : vector<8x1xf32>
      %56 = vector.broadcast %53 : vector<8x1xf32> to vector<8x8xf32>
      %57 = arith.subf %49, %56 : vector<8x8xf32>
      %58 = math.exp %57 : vector<8x8xf32>
      %c0_31 = arith.constant 0 : index
      %c1_32 = arith.constant 1 : index
      %59 = vector.load %arg8[%c0_31, %c1_32] : memref<8x4xf32, #tpu.memory_space<vmem>>, vector<8x1xf32>
      %60 = arith.mulf %55, %59 : vector<8x1xf32>
      %cst_33 = arith.constant dense<0.000000e+00> : vector<8xf32>
      %61 = vector.multi_reduction <add>, %58, %cst_33 [1] : vector<8x8xf32> to vector<8xf32>
      %62 = vector.shape_cast %61 : vector<8xf32> to vector<8x1xf32>
      %63 = arith.addf %60, %62 : vector<8x1xf32>
      %c0_34 = arith.constant 0 : index
      %c1_35 = arith.constant 1 : index
      %64 = vector.load %arg8[%c0_34, %c1_35] : memref<8x4xf32, #tpu.memory_space<vmem>>, vector<8x1xf32>
      tpu.vector_store %arg8[%c0_34, %c1_35], %63 {strides = array<i32>} : memref<8x4xf32, #tpu.memory_space<vmem>>, vector<8x1xf32>,
      %c0_36 = arith.constant 0 : index
      %c16 = arith.constant 16 : index
      %65 = vector.load %arg9[%c0_36, %c16] : memref<8x64xf32, #tpu.memory_space<vmem>>, vector<8x16xf32>
      %66 = vector.broadcast %55 : vector<8x1xf32> to vector<8x16xf32>
      %67 = arith.mulf %66, %65 : vector<8x16xf32>
      %68 = arith.truncf %58 : vector<8x8xf32> to vector<8x8xbf16>
      %cst_37 = arith.constant dense<0.000000e+00> : vector<8x16xf32>
      %69 = tpu.matmul %68, %46, %cst_37 {dimension_numbers = #tpu.dot_dimension_numbers<[1], [0], [0], [1], [0, 0, 1, 1], [], []>} : vector<8x8xbf16>, vector<8x16xbf16>, vector<8x16xf32> -> vector<8x16xf32>
      %70 = arith.addf %67, %69 : vector<8x16xf32>
      %c0_38 = arith.constant 0 : index
      %c16_39 = arith.constant 16 : index
      %71 = vector.load %arg9[%c0_38, %c16_39] : memref<8x64xf32, #tpu.memory_space<vmem>>, vector<8x16xf32>
      tpu.vector_store %arg9[%c0_38, %c16_39], %70 {strides = array<i32>} : memref<8x64xf32, #tpu.memory_space<vmem>>, vector<8x16xf32>,
      %c0_40 = arith.constant 0 : index
      %c1_41 = arith.constant 1 : index
      %72 = vector.load %arg7[%c0_40, %c1_41] : memref<8x4xf32, #tpu.memory_space<vmem>>, vector<8x1xf32>
      tpu.vector_store %arg7[%c0_40, %c1_41], %53 {strides = array<i32>} : memref<8x4xf32, #tpu.memory_space<vmem>>, vector<8x1xf32>,
      %73 = vector.extract_strided_slice %10 {offsets = [0, 32], sizes = [8, 16], strides = [1, 1]} : vector<8x64xbf16> to vector<8x16xbf16>
      %74 = vector.extract_strided_slice %12 {offsets = [0, 16], sizes = [8, 16], strides = [1, 1]} : vector<8x32xbf16> to vector<8x16xbf16>
      %75 = vector.extract_strided_slice %14 {offsets = [0, 16], sizes = [8, 16], strides = [1, 1]} : vector<8x32xbf16> to vector<8x16xbf16>
      %cst_42 = arith.constant dense<0.000000e+00> : vector<8x8xf32>
      %76 = tpu.matmul %73, %74, %cst_42 {dimension_numbers = #tpu.dot_dimension_numbers<[1], [1], [0], [0], [0, 0, 1, 0], [], []>} : vector<8x16xbf16>, vector<8x16xbf16>, vector<8x8xf32> -> vector<8x8xf32>
      %cst_43 = arith.constant 2.500000e-01 : f32
      %77 = vector.broadcast %cst_43 : f32 to vector<8x8xf32>
      %78 = arith.mulf %76, %77 : vector<8x8xf32>
      %c0_44 = arith.constant 0 : index
      %c2 = arith.constant 2 : index
      %79 = vector.load %arg7[%c0_44, %c2] : memref<8x4xf32, #tpu.memory_space<vmem>>, vector<8x1xf32>
      %cst_45 = arith.constant dense<0xFF800000> : vector<8xf32>
      %80 = vector.multi_reduction <maximumf>, %78, %cst_45 [1] : vector<8x8xf32> to vector<8xf32>
      %81 = vector.shape_cast %80 : vector<8xf32> to vector<8x1xf32>
      %82 = arith.maximumf %79, %81 : vector<8x1xf32>
      %83 = arith.subf %79, %82 : vector<8x1xf32>
      %84 = math.exp %83 : vector<8x1xf32>
      %85 = vector.broadcast %82 : vector<8x1xf32> to vector<8x8xf32>
      %86 = arith.subf %78, %85 : vector<8x8xf32>
      %87 = math.exp %86 : vector<8x8xf32>
      %c0_46 = arith.constant 0 : index
      %c2_47 = arith.constant 2 : index
      %88 = vector.load %arg8[%c0_46, %c2_47] : memref<8x4xf32, #tpu.memory_space<vmem>>, vector<8x1xf32>
      %89 = arith.mulf %84, %88 : vector<8x1xf32>
      %cst_48 = arith.constant dense<0.000000e+00> : vector<8xf32>
      %90 = vector.multi_reduction <add>, %87, %cst_48 [1] : vector<8x8xf32> to vector<8xf32>
      %91 = vector.shape_cast %90 : vector<8xf32> to vector<8x1xf32>
      %92 = arith.addf %89, %91 : vector<8x1xf32>
      %c0_49 = arith.constant 0 : index
      %c2_50 = arith.constant 2 : index
      %93 = vector.load %arg8[%c0_49, %c2_50] : memref<8x4xf32, #tpu.memory_space<vmem>>, vector<8x1xf32>
      tpu.vector_store %arg8[%c0_49, %c2_50], %92 {strides = array<i32>} : memref<8x4xf32, #tpu.memory_space<vmem>>, vector<8x1xf32>,
      %c0_51 = arith.constant 0 : index
      %c32 = arith.constant 32 : index
      %94 = vector.load %arg9[%c0_51, %c32] : memref<8x64xf32, #tpu.memory_space<vmem>>, vector<8x16xf32>
      %95 = vector.broadcast %84 : vector<8x1xf32> to vector<8x16xf32>
      %96 = arith.mulf %95, %94 : vector<8x16xf32>
      %97 = arith.truncf %87 : vector<8x8xf32> to vector<8x8xbf16>
      %cst_52 = arith.constant dense<0.000000e+00> : vector<8x16xf32>
      %98 = tpu.matmul %97, %75, %cst_52 {dimension_numbers = #tpu.dot_dimension_numbers<[1], [0], [0], [1], [0, 0, 1, 1], [], []>} : vector<8x8xbf16>, vector<8x16xbf16>, vector<8x16xf32> -> vector<8x16xf32>
      %99 = arith.addf %96, %98 : vector<8x16xf32>
      %c0_53 = arith.constant 0 : index
      %c32_54 = arith.constant 32 : index
      %100 = vector.load %arg9[%c0_53, %c32_54] : memref<8x64xf32, #tpu.memory_space<vmem>>, vector<8x16xf32>
      tpu.vector_store %arg9[%c0_53, %c32_54], %99 {strides = array<i32>} : memref<8x64xf32, #tpu.memory_space<vmem>>, vector<8x16xf32>,
      %c0_55 = arith.constant 0 : index
      %c2_56 = arith.constant 2 : index
      %101 = vector.load %arg7[%c0_55, %c2_56] : memref<8x4xf32, #tpu.memory_space<vmem>>, vector<8x1xf32>
      tpu.vector_store %arg7[%c0_55, %c2_56], %82 {strides = array<i32>} : memref<8x4xf32, #tpu.memory_space<vmem>>, vector<8x1xf32>,
      %102 = vector.extract_strided_slice %10 {offsets = [0, 48], sizes = [8, 16], strides = [1, 1]} : vector<8x64xbf16> to vector<8x16xbf16>
      %103 = vector.extract_strided_slice %12 {offsets = [0, 16], sizes = [8, 16], strides = [1, 1]} : vector<8x32xbf16> to vector<8x16xbf16>
      %104 = vector.extract_strided_slice %14 {offsets = [0, 16], sizes = [8, 16], strides = [1, 1]} : vector<8x32xbf16> to vector<8x16xbf16>
      %cst_57 = arith.constant dense<0.000000e+00> : vector<8x8xf32>
      %105 = tpu.matmul %102, %103, %cst_57 {dimension_numbers = #tpu.dot_dimension_numbers<[1], [1], [0], [0], [0, 0, 1, 0], [], []>} : vector<8x16xbf16>, vector<8x16xbf16>, vector<8x8xf32> -> vector<8x8xf32>
      %cst_58 = arith.constant 2.500000e-01 : f32
      %106 = vector.broadcast %cst_58 : f32 to vector<8x8xf32>
      %107 = arith.mulf %105, %106 : vector<8x8xf32>
      %c0_59 = arith.constant 0 : index
      %c3 = arith.constant 3 : index
      %108 = vector.load %arg7[%c0_59, %c3] : memref<8x4xf32, #tpu.memory_space<vmem>>, vector<8x1xf32>
      %cst_60 = arith.constant dense<0xFF800000> : vector<8xf32>
      %109 = vector.multi_reduction <maximumf>, %107, %cst_60 [1] : vector<8x8xf32> to vector<8xf32>
      %110 = vector.shape_cast %109 : vector<8xf32> to vector<8x1xf32>
      %111 = arith.maximumf %108, %110 : vector<8x1xf32>
      %112 = arith.subf %108, %111 : vector<8x1xf32>
      %113 = math.exp %112 : vector<8x1xf32>
      %114 = vector.broadcast %111 : vector<8x1xf32> to vector<8x8xf32>
      %115 = arith.subf %107, %114 : vector<8x8xf32>
      %116 = math.exp %115 : vector<8x8xf32>
      %c0_61 = arith.constant 0 : index
      %c3_62 = arith.constant 3 : index
      %117 = vector.load %arg8[%c0_61, %c3_62] : memref<8x4xf32, #tpu.memory_space<vmem>>, vector<8x1xf32>
      %118 = arith.mulf %113, %117 : vector<8x1xf32>
      %cst_63 = arith.constant dense<0.000000e+00> : vector<8xf32>
      %119 = vector.multi_reduction <add>, %116, %cst_63 [1] : vector<8x8xf32> to vector<8xf32>
      %120 = vector.shape_cast %119 : vector<8xf32> to vector<8x1xf32>
      %121 = arith.addf %118, %120 : vector<8x1xf32>
      %c0_64 = arith.constant 0 : index
      %c3_65 = arith.constant 3 : index
      %122 = vector.load %arg8[%c0_64, %c3_65] : memref<8x4xf32, #tpu.memory_space<vmem>>, vector<8x1xf32>
      tpu.vector_store %arg8[%c0_64, %c3_65], %121 {strides = array<i32>} : memref<8x4xf32, #tpu.memory_space<vmem>>, vector<8x1xf32>,
      %c0_66 = arith.constant 0 : index
      %c48 = arith.constant 48 : index
      %123 = vector.load %arg9[%c0_66, %c48] : memref<8x64xf32, #tpu.memory_space<vmem>>, vector<8x16xf32>
      %124 = vector.broadcast %113 : vector<8x1xf32> to vector<8x16xf32>
      %125 = arith.mulf %124, %123 : vector<8x16xf32>
      %126 = arith.truncf %116 : vector<8x8xf32> to vector<8x8xbf16>
      %cst_67 = arith.constant dense<0.000000e+00> : vector<8x16xf32>
      %127 = tpu.matmul %126, %104, %cst_67 {dimension_numbers = #tpu.dot_dimension_numbers<[1], [0], [0], [1], [0, 0, 1, 1], [], []>} : vector<8x8xbf16>, vector<8x16xbf16>, vector<8x16xf32> -> vector<8x16xf32>
      %128 = arith.addf %125, %127 : vector<8x16xf32>
      %c0_68 = arith.constant 0 : index
      %c48_69 = arith.constant 48 : index
      %129 = vector.load %arg9[%c0_68, %c48_69] : memref<8x64xf32, #tpu.memory_space<vmem>>, vector<8x16xf32>
      tpu.vector_store %arg9[%c0_68, %c48_69], %128 {strides = array<i32>} : memref<8x64xf32, #tpu.memory_space<vmem>>, vector<8x16xf32>,
      %c0_70 = arith.constant 0 : index
      %c3_71 = arith.constant 3 : index
      %130 = vector.load %arg7[%c0_70, %c3_71] : memref<8x4xf32, #tpu.memory_space<vmem>>, vector<8x1xf32>
      tpu.vector_store %arg7[%c0_70, %c3_71], %111 {strides = array<i32>} : memref<8x4xf32, #tpu.memory_space<vmem>>, vector<8x1xf32>,
    } else {
    }
    %6 = arith.cmpi eq, %arg2, %arg1 : i32
    %7 = arith.extui %6 : i1 to i32
    %c0_i32_2 = arith.constant 0 : i32
    %8 = arith.cmpi ne, %7, %c0_i32_2 : i32
    scf.if %8 {
      %c0 = arith.constant 0 : index
      %c0_3 = arith.constant 0 : index
      %c0_4 = arith.constant 0 : index
      %9 = vector.load %arg3[%c0, %c0_3, %c0_4] : memref<1x8x64xbf16, #tpu.memory_space<vmem>>, vector<1x8x64xbf16>
      %10 = vector.shape_cast %9 : vector<1x8x64xbf16> to vector<8x64xbf16>
      %c0_5 = arith.constant 0 : index
      %c0_6 = arith.constant 0 : index
      %c0_7 = arith.constant 0 : index
      %11 = vector.load %arg4[%c0_5, %c0_6, %c0_7] : memref<1x8x32xbf16, #tpu.memory_space<vmem>>, vector<1x8x32xbf16>
      %12 = vector.shape_cast %11 : vector<1x8x32xbf16> to vector<8x32xbf16>
      %c0_8 = arith.constant 0 : index
      %c0_9 = arith.constant 0 : index
      %c0_10 = arith.constant 0 : index
      %13 = vector.load %arg5[%c0_8, %c0_9, %c0_10] : memref<1x8x32xbf16, #tpu.memory_space<vmem>>, vector<1x8x32xbf16>
      %14 = vector.shape_cast %13 : vector<1x8x32xbf16> to vector<8x32xbf16>
      %15 = tpu.iota {dimensions = array<i32: 0>} : vector<8x8xi32>
      %16 = tpu.iota {dimensions = array<i32: 1>} : vector<8x8xi32>
      %17 = vector.extract_strided_slice %10 {offsets = [0, 0], sizes = [8, 16], strides = [1, 1]} : vector<8x64xbf16> to vector<8x16xbf16>
      %18 = vector.extract_strided_slice %12 {offsets = [0, 0], sizes = [8, 16], strides = [1, 1]} : vector<8x32xbf16> to vector<8x16xbf16>
      %19 = vector.extract_strided_slice %14 {offsets = [0, 0], sizes = [8, 16], strides = [1, 1]} : vector<8x32xbf16> to vector<8x16xbf16>
      %cst = arith.constant dense<0.000000e+00> : vector<8x8xf32>
      %20 = tpu.matmul %17, %18, %cst {dimension_numbers = #tpu.dot_dimension_numbers<[1], [1], [0], [0], [0, 0, 1, 0], [], []>} : vector<8x16xbf16>, vector<8x16xbf16>, vector<8x8xf32> -> vector<8x8xf32>
      %cst_11 = arith.constant 2.500000e-01 : f32
      %21 = vector.broadcast %cst_11 : f32 to vector<8x8xf32>
      %22 = arith.mulf %20, %21 : vector<8x8xf32>
      %23 = arith.cmpi sgt, %16, %15 : vector<8x8xi32>
      %cst_12 = arith.constant 0xFF800000 : f32
      %24 = vector.broadcast %cst_12 : f32 to vector<8x8xf32>
      %25 = arith.select %23, %24, %22 : vector<8x8xi1>, vector<8x8xf32>
      %c0_13 = arith.constant 0 : index
      %c0_14 = arith.constant 0 : index
      %26 = vector.load %arg7[%c0_13, %c0_14] : memref<8x4xf32, #tpu.memory_space<vmem>>, vector<8x1xf32>
      %cst_15 = arith.constant dense<0xFF800000> : vector<8xf32>
      %27 = vector.multi_reduction <maximumf>, %25, %cst_15 [1] : vector<8x8xf32> to vector<8xf32>
      %28 = vector.shape_cast %27 : vector<8xf32> to vector<8x1xf32>
      %29 = arith.maximumf %26, %28 : vector<8x1xf32>
      %30 = arith.subf %26, %29 : vector<8x1xf32>
      %31 = math.exp %30 : vector<8x1xf32>
      %32 = vector.broadcast %29 : vector<8x1xf32> to vector<8x8xf32>
      %33 = arith.subf %25, %32 : vector<8x8xf32>
      %34 = math.exp %33 : vector<8x8xf32>
      %c0_16 = arith.constant 0 : index
      %c0_17 = arith.constant 0 : index
      %35 = vector.load %arg8[%c0_16, %c0_17] : memref<8x4xf32, #tpu.memory_space<vmem>>, vector<8x1xf32>
      %36 = arith.mulf %31, %35 : vector<8x1xf32>
      %cst_18 = arith.constant dense<0.000000e+00> : vector<8xf32>
      %37 = vector.multi_reduction <add>, %34, %cst_18 [1] : vector<8x8xf32> to vector<8xf32>
      %38 = vector.shape_cast %37 : vector<8xf32> to vector<8x1xf32>
      %39 = arith.addf %36, %38 : vector<8x1xf32>
      %c0_19 = arith.constant 0 : index
      %c0_20 = arith.constant 0 : index
      %40 = vector.load %arg8[%c0_19, %c0_20] : memref<8x4xf32, #tpu.memory_space<vmem>>, vector<8x1xf32>
      tpu.vector_store %arg8[%c0_19, %c0_20], %39 {strides = array<i32>} : memref<8x4xf32, #tpu.memory_space<vmem>>, vector<8x1xf32>,
      %c0_21 = arith.constant 0 : index
      %c0_22 = arith.constant 0 : index
      %41 = vector.load %arg9[%c0_21, %c0_22] : memref<8x64xf32, #tpu.memory_space<vmem>>, vector<8x16xf32>
      %42 = vector.broadcast %31 : vector<8x1xf32> to vector<8x16xf32>
      %43 = arith.mulf %42, %41 : vector<8x16xf32>
      %44 = arith.truncf %34 : vector<8x8xf32> to vector<8x8xbf16>
      %cst_23 = arith.constant dense<0.000000e+00> : vector<8x16xf32>
      %45 = tpu.matmul %44, %19, %cst_23 {dimension_numbers = #tpu.dot_dimension_numbers<[1], [0], [0], [1], [0, 0, 1, 1], [], []>} : vector<8x8xbf16>, vector<8x16xbf16>, vector<8x16xf32> -> vector<8x16xf32>
      %46 = arith.addf %43, %45 : vector<8x16xf32>
      %c0_24 = arith.constant 0 : index
      %c0_25 = arith.constant 0 : index
      %47 = vector.load %arg9[%c0_24, %c0_25] : memref<8x64xf32, #tpu.memory_space<vmem>>, vector<8x16xf32>
      tpu.vector_store %arg9[%c0_24, %c0_25], %46 {strides = array<i32>} : memref<8x64xf32, #tpu.memory_space<vmem>>, vector<8x16xf32>,
      %c0_26 = arith.constant 0 : index
      %c0_27 = arith.constant 0 : index
      %48 = vector.load %arg7[%c0_26, %c0_27] : memref<8x4xf32, #tpu.memory_space<vmem>>, vector<8x1xf32>
      tpu.vector_store %arg7[%c0_26, %c0_27], %29 {strides = array<i32>} : memref<8x4xf32, #tpu.memory_space<vmem>>, vector<8x1xf32>,
      %49 = vector.extract_strided_slice %10 {offsets = [0, 16], sizes = [8, 16], strides = [1, 1]} : vector<8x64xbf16> to vector<8x16xbf16>
      %50 = vector.extract_strided_slice %12 {offsets = [0, 0], sizes = [8, 16], strides = [1, 1]} : vector<8x32xbf16> to vector<8x16xbf16>
      %51 = vector.extract_strided_slice %14 {offsets = [0, 0], sizes = [8, 16], strides = [1, 1]} : vector<8x32xbf16> to vector<8x16xbf16>
      %cst_28 = arith.constant dense<0.000000e+00> : vector<8x8xf32>
      %52 = tpu.matmul %49, %50, %cst_28 {dimension_numbers = #tpu.dot_dimension_numbers<[1], [1], [0], [0], [0, 0, 1, 0], [], []>} : vector<8x16xbf16>, vector<8x16xbf16>, vector<8x8xf32> -> vector<8x8xf32>
      %cst_29 = arith.constant 2.500000e-01 : f32
      %53 = vector.broadcast %cst_29 : f32 to vector<8x8xf32>
      %54 = arith.mulf %52, %53 : vector<8x8xf32>
      %55 = arith.cmpi sgt, %16, %15 : vector<8x8xi32>
      %cst_30 = arith.constant 0xFF800000 : f32
      %56 = vector.broadcast %cst_30 : f32 to vector<8x8xf32>
      %57 = arith.select %55, %56, %54 : vector<8x8xi1>, vector<8x8xf32>
      %c0_31 = arith.constant 0 : index
      %c1 = arith.constant 1 : index
      %58 = vector.load %arg7[%c0_31, %c1] : memref<8x4xf32, #tpu.memory_space<vmem>>, vector<8x1xf32>
      %cst_32 = arith.constant dense<0xFF800000> : vector<8xf32>
      %59 = vector.multi_reduction <maximumf>, %57, %cst_32 [1] : vector<8x8xf32> to vector<8xf32>
      %60 = vector.shape_cast %59 : vector<8xf32> to vector<8x1xf32>
      %61 = arith.maximumf %58, %60 : vector<8x1xf32>
      %62 = arith.subf %58, %61 : vector<8x1xf32>
      %63 = math.exp %62 : vector<8x1xf32>
      %64 = vector.broadcast %61 : vector<8x1xf32> to vector<8x8xf32>
      %65 = arith.subf %57, %64 : vector<8x8xf32>
      %66 = math.exp %65 : vector<8x8xf32>
      %c0_33 = arith.constant 0 : index
      %c1_34 = arith.constant 1 : index
      %67 = vector.load %arg8[%c0_33, %c1_34] : memref<8x4xf32, #tpu.memory_space<vmem>>, vector<8x1xf32>
      %68 = arith.mulf %63, %67 : vector<8x1xf32>
      %cst_35 = arith.constant dense<0.000000e+00> : vector<8xf32>
      %69 = vector.multi_reduction <add>, %66, %cst_35 [1] : vector<8x8xf32> to vector<8xf32>
      %70 = vector.shape_cast %69 : vector<8xf32> to vector<8x1xf32>
      %71 = arith.addf %68, %70 : vector<8x1xf32>
      %c0_36 = arith.constant 0 : index
      %c1_37 = arith.constant 1 : index
      %72 = vector.load %arg8[%c0_36, %c1_37] : memref<8x4xf32, #tpu.memory_space<vmem>>, vector<8x1xf32>
      tpu.vector_store %arg8[%c0_36, %c1_37], %71 {strides = array<i32>} : memref<8x4xf32, #tpu.memory_space<vmem>>, vector<8x1xf32>,
      %c0_38 = arith.constant 0 : index
      %c16 = arith.constant 16 : index
      %73 = vector.load %arg9[%c0_38, %c16] : memref<8x64xf32, #tpu.memory_space<vmem>>, vector<8x16xf32>
      %74 = vector.broadcast %63 : vector<8x1xf32> to vector<8x16xf32>
      %75 = arith.mulf %74, %73 : vector<8x16xf32>
      %76 = arith.truncf %66 : vector<8x8xf32> to vector<8x8xbf16>
      %cst_39 = arith.constant dense<0.000000e+00> : vector<8x16xf32>
      %77 = tpu.matmul %76, %51, %cst_39 {dimension_numbers = #tpu.dot_dimension_numbers<[1], [0], [0], [1], [0, 0, 1, 1], [], []>} : vector<8x8xbf16>, vector<8x16xbf16>, vector<8x16xf32> -> vector<8x16xf32>
      %78 = arith.addf %75, %77 : vector<8x16xf32>
      %c0_40 = arith.constant 0 : index
      %c16_41 = arith.constant 16 : index
      %79 = vector.load %arg9[%c0_40, %c16_41] : memref<8x64xf32, #tpu.memory_space<vmem>>, vector<8x16xf32>
      tpu.vector_store %arg9[%c0_40, %c16_41], %78 {strides = array<i32>} : memref<8x64xf32, #tpu.memory_space<vmem>>, vector<8x16xf32>,
      %c0_42 = arith.constant 0 : index
      %c1_43 = arith.constant 1 : index
      %80 = vector.load %arg7[%c0_42, %c1_43] : memref<8x4xf32, #tpu.memory_space<vmem>>, vector<8x1xf32>
      tpu.vector_store %arg7[%c0_42, %c1_43], %61 {strides = array<i32>} : memref<8x4xf32, #tpu.memory_space<vmem>>, vector<8x1xf32>,
      %81 = vector.extract_strided_slice %10 {offsets = [0, 32], sizes = [8, 16], strides = [1, 1]} : vector<8x64xbf16> to vector<8x16xbf16>
      %82 = vector.extract_strided_slice %12 {offsets = [0, 16], sizes = [8, 16], strides = [1, 1]} : vector<8x32xbf16> to vector<8x16xbf16>
      %83 = vector.extract_strided_slice %14 {offsets = [0, 16], sizes = [8, 16], strides = [1, 1]} : vector<8x32xbf16> to vector<8x16xbf16>
      %cst_44 = arith.constant dense<0.000000e+00> : vector<8x8xf32>
      %84 = tpu.matmul %81, %82, %cst_44 {dimension_numbers = #tpu.dot_dimension_numbers<[1], [1], [0], [0], [0, 0, 1, 0], [], []>} : vector<8x16xbf16>, vector<8x16xbf16>, vector<8x8xf32> -> vector<8x8xf32>
      %cst_45 = arith.constant 2.500000e-01 : f32
      %85 = vector.broadcast %cst_45 : f32 to vector<8x8xf32>
      %86 = arith.mulf %84, %85 : vector<8x8xf32>
      %87 = arith.cmpi sgt, %16, %15 : vector<8x8xi32>
      %cst_46 = arith.constant 0xFF800000 : f32
      %88 = vector.broadcast %cst_46 : f32 to vector<8x8xf32>
      %89 = arith.select %87, %88, %86 : vector<8x8xi1>, vector<8x8xf32>
      %c0_47 = arith.constant 0 : index
      %c2 = arith.constant 2 : index
      %90 = vector.load %arg7[%c0_47, %c2] : memref<8x4xf32, #tpu.memory_space<vmem>>, vector<8x1xf32>
      %cst_48 = arith.constant dense<0xFF800000> : vector<8xf32>
      %91 = vector.multi_reduction <maximumf>, %89, %cst_48 [1] : vector<8x8xf32> to vector<8xf32>
      %92 = vector.shape_cast %91 : vector<8xf32> to vector<8x1xf32>
      %93 = arith.maximumf %90, %92 : vector<8x1xf32>
      %94 = arith.subf %90, %93 : vector<8x1xf32>
      %95 = math.exp %94 : vector<8x1xf32>
      %96 = vector.broadcast %93 : vector<8x1xf32> to vector<8x8xf32>
      %97 = arith.subf %89, %96 : vector<8x8xf32>
      %98 = math.exp %97 : vector<8x8xf32>
      %c0_49 = arith.constant 0 : index
      %c2_50 = arith.constant 2 : index
      %99 = vector.load %arg8[%c0_49, %c2_50] : memref<8x4xf32, #tpu.memory_space<vmem>>, vector<8x1xf32>
      %100 = arith.mulf %95, %99 : vector<8x1xf32>
      %cst_51 = arith.constant dense<0.000000e+00> : vector<8xf32>
      %101 = vector.multi_reduction <add>, %98, %cst_51 [1] : vector<8x8xf32> to vector<8xf32>
      %102 = vector.shape_cast %101 : vector<8xf32> to vector<8x1xf32>
      %103 = arith.addf %100, %102 : vector<8x1xf32>
      %c0_52 = arith.constant 0 : index
      %c2_53 = arith.constant 2 : index
      %104 = vector.load %arg8[%c0_52, %c2_53] : memref<8x4xf32, #tpu.memory_space<vmem>>, vector<8x1xf32>
      tpu.vector_store %arg8[%c0_52, %c2_53], %103 {strides = array<i32>} : memref<8x4xf32, #tpu.memory_space<vmem>>, vector<8x1xf32>,
      %c0_54 = arith.constant 0 : index
      %c32 = arith.constant 32 : index
      %105 = vector.load %arg9[%c0_54, %c32] : memref<8x64xf32, #tpu.memory_space<vmem>>, vector<8x16xf32>
      %106 = vector.broadcast %95 : vector<8x1xf32> to vector<8x16xf32>
      %107 = arith.mulf %106, %105 : vector<8x16xf32>
      %108 = arith.truncf %98 : vector<8x8xf32> to vector<8x8xbf16>
      %cst_55 = arith.constant dense<0.000000e+00> : vector<8x16xf32>
      %109 = tpu.matmul %108, %83, %cst_55 {dimension_numbers = #tpu.dot_dimension_numbers<[1], [0], [0], [1], [0, 0, 1, 1], [], []>} : vector<8x8xbf16>, vector<8x16xbf16>, vector<8x16xf32> -> vector<8x16xf32>
      %110 = arith.addf %107, %109 : vector<8x16xf32>
      %c0_56 = arith.constant 0 : index
      %c32_57 = arith.constant 32 : index
      %111 = vector.load %arg9[%c0_56, %c32_57] : memref<8x64xf32, #tpu.memory_space<vmem>>, vector<8x16xf32>
      tpu.vector_store %arg9[%c0_56, %c32_57], %110 {strides = array<i32>} : memref<8x64xf32, #tpu.memory_space<vmem>>, vector<8x16xf32>,
      %c0_58 = arith.constant 0 : index
      %c2_59 = arith.constant 2 : index
      %112 = vector.load %arg7[%c0_58, %c2_59] : memref<8x4xf32, #tpu.memory_space<vmem>>, vector<8x1xf32>
      tpu.vector_store %arg7[%c0_58, %c2_59], %93 {strides = array<i32>} : memref<8x4xf32, #tpu.memory_space<vmem>>, vector<8x1xf32>,
      %113 = vector.extract_strided_slice %10 {offsets = [0, 48], sizes = [8, 16], strides = [1, 1]} : vector<8x64xbf16> to vector<8x16xbf16>
      %114 = vector.extract_strided_slice %12 {offsets = [0, 16], sizes = [8, 16], strides = [1, 1]} : vector<8x32xbf16> to vector<8x16xbf16>
      %115 = vector.extract_strided_slice %14 {offsets = [0, 16], sizes = [8, 16], strides = [1, 1]} : vector<8x32xbf16> to vector<8x16xbf16>
      %cst_60 = arith.constant dense<0.000000e+00> : vector<8x8xf32>
      %116 = tpu.matmul %113, %114, %cst_60 {dimension_numbers = #tpu.dot_dimension_numbers<[1], [1], [0], [0], [0, 0, 1, 0], [], []>} : vector<8x16xbf16>, vector<8x16xbf16>, vector<8x8xf32> -> vector<8x8xf32>
      %cst_61 = arith.constant 2.500000e-01 : f32
      %117 = vector.broadcast %cst_61 : f32 to vector<8x8xf32>
      %118 = arith.mulf %116, %117 : vector<8x8xf32>
      %119 = arith.cmpi sgt, %16, %15 : vector<8x8xi32>
      %cst_62 = arith.constant 0xFF800000 : f32
      %120 = vector.broadcast %cst_62 : f32 to vector<8x8xf32>
      %121 = arith.select %119, %120, %118 : vector<8x8xi1>, vector<8x8xf32>
      %c0_63 = arith.constant 0 : index
      %c3 = arith.constant 3 : index
      %122 = vector.load %arg7[%c0_63, %c3] : memref<8x4xf32, #tpu.memory_space<vmem>>, vector<8x1xf32>
      %cst_64 = arith.constant dense<0xFF800000> : vector<8xf32>
      %123 = vector.multi_reduction <maximumf>, %121, %cst_64 [1] : vector<8x8xf32> to vector<8xf32>
      %124 = vector.shape_cast %123 : vector<8xf32> to vector<8x1xf32>
      %125 = arith.maximumf %122, %124 : vector<8x1xf32>
      %126 = arith.subf %122, %125 : vector<8x1xf32>
      %127 = math.exp %126 : vector<8x1xf32>
      %128 = vector.broadcast %125 : vector<8x1xf32> to vector<8x8xf32>
      %129 = arith.subf %121, %128 : vector<8x8xf32>
      %130 = math.exp %129 : vector<8x8xf32>
      %c0_65 = arith.constant 0 : index
      %c3_66 = arith.constant 3 : index
      %131 = vector.load %arg8[%c0_65, %c3_66] : memref<8x4xf32, #tpu.memory_space<vmem>>, vector<8x1xf32>
      %132 = arith.mulf %127, %131 : vector<8x1xf32>
      %cst_67 = arith.constant dense<0.000000e+00> : vector<8xf32>
      %133 = vector.multi_reduction <add>, %130, %cst_67 [1] : vector<8x8xf32> to vector<8xf32>
      %134 = vector.shape_cast %133 : vector<8xf32> to vector<8x1xf32>
      %135 = arith.addf %132, %134 : vector<8x1xf32>
      %c0_68 = arith.constant 0 : index
      %c3_69 = arith.constant 3 : index
      %136 = vector.load %arg8[%c0_68, %c3_69] : memref<8x4xf32, #tpu.memory_space<vmem>>, vector<8x1xf32>
      tpu.vector_store %arg8[%c0_68, %c3_69], %135 {strides = array<i32>} : memref<8x4xf32, #tpu.memory_space<vmem>>, vector<8x1xf32>,
      %c0_70 = arith.constant 0 : index
      %c48 = arith.constant 48 : index
      %137 = vector.load %arg9[%c0_70, %c48] : memref<8x64xf32, #tpu.memory_space<vmem>>, vector<8x16xf32>
      %138 = vector.broadcast %127 : vector<8x1xf32> to vector<8x16xf32>
      %139 = arith.mulf %138, %137 : vector<8x16xf32>
      %140 = arith.truncf %130 : vector<8x8xf32> to vector<8x8xbf16>
      %cst_71 = arith.constant dense<0.000000e+00> : vector<8x16xf32>
      %141 = tpu.matmul %140, %115, %cst_71 {dimension_numbers = #tpu.dot_dimension_numbers<[1], [0], [0], [1], [0, 0, 1, 1], [], []>} : vector<8x8xbf16>, vector<8x16xbf16>, vector<8x16xf32> -> vector<8x16xf32>
      %142 = arith.addf %139, %141 : vector<8x16xf32>
      %c0_72 = arith.constant 0 : index
      %c48_73 = arith.constant 48 : index
      %143 = vector.load %arg9[%c0_72, %c48_73] : memref<8x64xf32, #tpu.memory_space<vmem>>, vector<8x16xf32>
      tpu.vector_store %arg9[%c0_72, %c48_73], %142 {strides = array<i32>} : memref<8x64xf32, #tpu.memory_space<vmem>>, vector<8x16xf32>,
      %c0_74 = arith.constant 0 : index
      %c3_75 = arith.constant 3 : index
      %144 = vector.load %arg7[%c0_74, %c3_75] : memref<8x4xf32, #tpu.memory_space<vmem>>, vector<8x1xf32>
      tpu.vector_store %arg7[%c0_74, %c3_75], %125 {strides = array<i32>} : memref<8x4xf32, #tpu.memory_space<vmem>>, vector<8x1xf32>,
      %c0_76 = arith.constant 0 : index
      %c0_77 = arith.constant 0 : index
      %145 = vector.load %arg8[%c0_76, %c0_77] : memref<8x4xf32, #tpu.memory_space<vmem>>, vector<8x1xf32>
      %146 = tpu.reciprocal %145 {approx = true} : vector<8x1xf32> -> vector<8x1xf32>
      %c0_78 = arith.constant 0 : index
      %c0_79 = arith.constant 0 : index
      %147 = vector.load %arg9[%c0_78, %c0_79] : memref<8x64xf32, #tpu.memory_space<vmem>>, vector<8x16xf32>
      %148 = vector.broadcast %146 : vector<8x1xf32> to vector<8x16xf32>
      %149 = arith.mulf %147, %148 : vector<8x16xf32>
      %150 = arith.truncf %149 : vector<8x16xf32> to vector<8x16xbf16>
      %c0_80 = arith.constant 0 : index
      %c0_81 = arith.constant 0 : index
      %c0_82 = arith.constant 0 : index
      %151 = vector.load %arg6[%c0_80, %c0_81, %c0_82] : memref<1x8x64xbf16, #tpu.memory_space<vmem>>, vector<1x8x16xbf16>
      %152 = vector.shape_cast %151 : vector<1x8x16xbf16> to vector<8x16xbf16>
      %153 = vector.shape_cast %150 : vector<8x16xbf16> to vector<1x8x16xbf16>
      tpu.vector_store %arg6[%c0_80, %c0_81, %c0_82], %153 {strides = array<i32>} : memref<1x8x64xbf16, #tpu.memory_space<vmem>>, vector<1x8x16xbf16>,
      %c0_83 = arith.constant 0 : index
      %c1_84 = arith.constant 1 : index
      %154 = vector.load %arg8[%c0_83, %c1_84] : memref<8x4xf32, #tpu.memory_space<vmem>>, vector<8x1xf32>
      %155 = tpu.reciprocal %154 {approx = true} : vector<8x1xf32> -> vector<8x1xf32>
      %c0_85 = arith.constant 0 : index
      %c16_86 = arith.constant 16 : index
      %156 = vector.load %arg9[%c0_85, %c16_86] : memref<8x64xf32, #tpu.memory_space<vmem>>, vector<8x16xf32>
      %157 = vector.broadcast %155 : vector<8x1xf32> to vector<8x16xf32>
      %158 = arith.mulf %156, %157 : vector<8x16xf32>
      %159 = arith.truncf %158 : vector<8x16xf32> to vector<8x16xbf16>
      %c0_87 = arith.constant 0 : index
      %c0_88 = arith.constant 0 : index
      %c16_89 = arith.constant 16 : index
      %160 = vector.load %arg6[%c0_87, %c0_88, %c16_89] : memref<1x8x64xbf16, #tpu.memory_space<vmem>>, vector<1x8x16xbf16>
      %161 = vector.shape_cast %160 : vector<1x8x16xbf16> to vector<8x16xbf16>
      %162 = vector.shape_cast %159 : vector<8x16xbf16> to vector<1x8x16xbf16>
      tpu.vector_store %arg6[%c0_87, %c0_88, %c16_89], %162 {strides = array<i32>} : memref<1x8x64xbf16, #tpu.memory_space<vmem>>, vector<1x8x16xbf16>,
      %c0_90 = arith.constant 0 : index
      %c2_91 = arith.constant 2 : index
      %163 = vector.load %arg8[%c0_90, %c2_91] : memref<8x4xf32, #tpu.memory_space<vmem>>, vector<8x1xf32>
      %164 = tpu.reciprocal %163 {approx = true} : vector<8x1xf32> -> vector<8x1xf32>
      %c0_92 = arith.constant 0 : index
      %c32_93 = arith.constant 32 : index
      %165 = vector.load %arg9[%c0_92, %c32_93] : memref<8x64xf32, #tpu.memory_space<vmem>>, vector<8x16xf32>
      %166 = vector.broadcast %164 : vector<8x1xf32> to vector<8x16xf32>
      %167 = arith.mulf %165, %166 : vector<8x16xf32>
      %168 = arith.truncf %167 : vector<8x16xf32> to vector<8x16xbf16>
      %c0_94 = arith.constant 0 : index
      %c0_95 = arith.constant 0 : index
      %c32_96 = arith.constant 32 : index
      %169 = vector.load %arg6[%c0_94, %c0_95, %c32_96] : memref<1x8x64xbf16, #tpu.memory_space<vmem>>, vector<1x8x16xbf16>
      %170 = vector.shape_cast %169 : vector<1x8x16xbf16> to vector<8x16xbf16>
      %171 = vector.shape_cast %168 : vector<8x16xbf16> to vector<1x8x16xbf16>
      tpu.vector_store %arg6[%c0_94, %c0_95, %c32_96], %171 {strides = array<i32>} : memref<1x8x64xbf16, #tpu.memory_space<vmem>>, vector<1x8x16xbf16>,
      %c0_97 = arith.constant 0 : index
      %c3_98 = arith.constant 3 : index
      %172 = vector.load %arg8[%c0_97, %c3_98] : memref<8x4xf32, #tpu.memory_space<vmem>>, vector<8x1xf32>
      %173 = tpu.reciprocal %172 {approx = true} : vector<8x1xf32> -> vector<8x1xf32>
      %c0_99 = arith.constant 0 : index
      %c48_100 = arith.constant 48 : index
      %174 = vector.load %arg9[%c0_99, %c48_100] : memref<8x64xf32, #tpu.memory_space<vmem>>, vector<8x16xf32>
      %175 = vector.broadcast %173 : vector<8x1xf32> to vector<8x16xf32>
      %176 = arith.mulf %174, %175 : vector<8x16xf32>
      %177 = arith.truncf %176 : vector<8x16xf32> to vector<8x16xbf16>
      %c0_101 = arith.constant 0 : index
      %c0_102 = arith.constant 0 : index
      %c48_103 = arith.constant 48 : index
      %178 = vector.load %arg6[%c0_101, %c0_102, %c48_103] : memref<1x8x64xbf16, #tpu.memory_space<vmem>>, vector<1x8x16xbf16>
      %179 = vector.shape_cast %178 : vector<1x8x16xbf16> to vector<8x16xbf16>
      %180 = vector.shape_cast %177 : vector<8x16xbf16> to vector<1x8x16xbf16>
      tpu.vector_store %arg6[%c0_101, %c0_102, %c48_103], %180 {strides = array<i32>} : memref<1x8x64xbf16, #tpu.memory_space<vmem>>, vector<1x8x16xbf16>,
    } else {
    }
    return
  }
  func.func @transform_0(%arg0: i32, %arg1: i32, %arg2: i32) -> (i32, i32, i32) {
    %c0_i32 = arith.constant 0 : i32
    %c0_i32_0 = arith.constant 0 : i32
    return %arg0, %arg1, %c0_i32 : i32, i32, i32
  }
  func.func @transform_1(%arg0: i32, %arg1: i32, %arg2: i32) -> (i32, i32, i32) {
    %0 = arith.minsi %arg2, %arg1 : i32
    %c0_i32 = arith.constant 0 : i32
    %c0_i32_0 = arith.constant 0 : i32
    return %arg0, %0, %c0_i32 : i32, i32, i32
  }
  func.func @transform_2(%arg0: i32, %arg1: i32, %arg2: i32) -> (i32, i32, i32) {
    %0 = arith.minsi %arg2, %arg1 : i32
    %c0_i32 = arith.constant 0 : i32
    %c0_i32_0 = arith.constant 0 : i32
    return %arg0, %0, %c0_i32 : i32, i32, i32
  }
  func.func @transform_3(%arg0: i32, %arg1: i32, %arg2: i32) -> (i32, i32, i32) {
    %c0_i32 = arith.constant 0 : i32
    %c0_i32_0 = arith.constant 0 : i32
    return %arg0, %arg1, %c0_i32 : i32, i32, i32
  }
}

</mosaic_0001>

<llo_original>
// kernel: _lambda_.3
$region0: #{_lambda_.3}
  #allocation0 [shape = 'u32[]', space=smem, size = 0x4, offset = 0x4, fixed_abs, tag = 'smem constant byte address 0x4 - core index']
  #allocation1 [shape = 'u32[144,128]{1,0:T(1,128)}', space=vmem, size = 0x12000, scoped, tag = 'internal scratch']
  #allocation2 [shape = 'f32[16,128]{1,0:T(8,128)}', space=vmem, size = 0x2000, scoped, tag = 'scratch operand']
  %s0 = inlined_call_operand.vmem [shape: bf16[16,64], index: 0, kind: input, shape index: {}]
  %s1 = inlined_call_operand.vmem [shape: bf16[64,128], index: 1, kind: input, shape index: {}]
  %s2 = inlined_call_operand.vmem [shape: bf16[16,128], index: 2, kind: output, shape index: {}]
  %s3 = sld [smem:[#allocation0]]
  $region26: #{_lambda_.3} parent=0
    _
  %s5 = ssub.s32 1, %s3
  %s6 = scalar_select 0, %s5, %s3
  // Predicated region
  $region2: #{_lambda_.3} parent=0 // pred_check
    _
  $region3: #{_lambda_.3} parent=0 // pred_check_branch
    %8 = sbr.rel (0) target = $region5
  $region4: #{_lambda_.3} parent=0 // pred_region
    _
  $region5: #{_lambda_.3} parent=0 // pred_fallthru
    _
  // Predicated region
  $region6: #{_lambda_.3} parent=0 // pred_check
    _
  $region7: #{_lambda_.3} parent=0 // pred_check_branch
    %10 = sbr.rel (0) target = $region9
  $region8: #{_lambda_.3} parent=0 // pred_region
    _
  $region9: #{_lambda_.3} parent=0 // pred_fallthru
    _
  %p12 = scmp.eq.s32.totalorder 0, 0
  // Predicated region
  $region10: #{_lambda_.3} parent=0 // pred_check
    %p13 = pneg %p12
  $region11: #{_lambda_.3} parent=0 // pred_check_branch
    %15 = sbr.rel (%p13) target = $region13
  $region12: #{_lambda_.3} parent=0 // pred_region
    %16 = vst [vmem:[#allocation2] sm:$0xff] 0.0
    %17 = vst [vmem:[#allocation2 + $0x8] sm:$0xff] 0.0
  $region13: #{_lambda_.3} parent=0 // pred_fallthru
    _
  %v18 = vld [vmem:[#allocation2] sm:$0xff]
  %v19 = vld [vmem:[#allocation2 + $0x8] sm:$0xff]
  %v20 = vld [vmem:[%s0] sm:$0xf]
  %v21 = vld [vmem:[%s0 + $0x4] sm:$0xf]
  %v22 = vld [vmem:[%s1] sm:$0xf]
  %v23 = vld [vmem:[%s1 + $0x4] sm:$0xf]
  %v24 = vld [vmem:[%s1 + $0x8] sm:$0xf]
  %v25 = vld [vmem:[%s1 + $0xc] sm:$0xf]
  %v26 = vld [vmem:[%s1 + $0x10] sm:$0xf]
  %v27 = vld [vmem:[%s1 + $0x14] sm:$0xf]
  %v28 = vld [vmem:[%s1 + $0x18] sm:$0xf]
  %v29 = vld [vmem:[%s1 + $0x1c] sm:$0xf]
  %v32 = vunpack.c.l.b16 %v20
  %v33 = vunpack.c.l.b16 %v21
  %v34 = vpack.c.b16 %v33, %v32
  %v43 = vunpack.c.l.b16 %v22
  %v44 = vunpack.c.l.b16 %v23
  %v45 = vunpack.c.l.b16 %v24
  %v46 = vunpack.c.l.b16 %v25
  %v47 = vunpack.c.l.b16 %v26
  %v48 = vunpack.c.l.b16 %v27
  %v49 = vunpack.c.l.b16 %v28
  %v50 = vunpack.c.l.b16 %v29
  %v51 = vpack.c.b16 %v44, %v43
  %v52 = vpack.c.b16 %v46, %v45
  %v53 = vpack.c.b16 %v48, %v47
  %v54 = vpack.c.b16 %v50, %v49
  %vm59 = vcmask 523264
  %v61 = vsel %vm59, %v34, 0
  %63 = vmatprep.subr.bf16.mxu0 0
  %64 = vmatpush1.bf16.msra.mxu0 0
  %65 = vmatprep.subr.bf16.mxu0 0
  %66 = vmatpush1.bf16.msra.mxu0 0
  %67 = vmatprep.subr.bf16.mxu0 0
  %68 = vmatpush1.bf16.msra.mxu0 0
  %69 = vmatprep.subr.bf16.mxu0 0
  %70 = vmatpush1.bf16.msra.mxu0 0
  %71 = vmatprep.subr.bf16.mxu0 0
  %72 = vmatpush1.bf16.msra.mxu0 %v54
  %73 = vmatprep.subr.bf16.mxu0 0
  %74 = vmatpush1.bf16.msra.mxu0 %v53
  %75 = vmatprep.subr.bf16.mxu0 0
  %76 = vmatpush1.bf16.msra.mxu0 %v52
  %77 = vmatprep.subr.bf16.mxu0 0
  %78 = vmatpush1.bf16.msra.mxu0 %v51
  %79 = vmatprep.subr.bf16.mxu0 0
  %80 = vmatpush2.bf16.msra.mxu0 0
  %81 = vmatprep.subr.bf16.mxu0 0
  %82 = vmatpush2.bf16.msra.mxu0 0
  %83 = vmatprep.subr.bf16.mxu0 0
  %84 = vmatpush2.bf16.msra.mxu0 0
  %85 = vmatprep.subr.bf16.mxu0 0
  %86 = vmatpush2.bf16.msra.mxu0 0
  %87 = vmatprep.subr.bf16.mxu0 0
  %88 = vmatpush2.bf16.msra.mxu0 0
  %89 = vmatprep.subr.bf16.mxu0 0
  %90 = vmatpush2.bf16.msra.mxu0 0
  %91 = vmatprep.subr.bf16.mxu0 0
  %92 = vmatpush2.bf16.msra.mxu0 0
  %93 = vmatprep.subr.bf16.mxu0 0
  %94 = vmatpush2.bf16.msra.mxu0 0
  %95 = vmatprep.mubr.bf16.mxu0 0
  %96 = vmatmul.mubr.bf16.gmra.mxu0 %v61
  %v97 = vpop.f32.mrf.mxu0
  %v98 = vadd.f32 0.0, %v97
  %v99 = vpop.f32.mrf.mxu0
  %v100 = vpop.f32.mrf.mxu0
  %v101 = vadd.f32 0.0, %v100
  %v102 = vpop.f32.mrf.mxu0
  %103 = vdwg.mxu0
  %v104 = vadd.f32 %v18, %v98
  %v105 = vadd.f32 %v19, %v101
  %106 = vst [vmem:[#allocation2] sm:$0xff] %v104
  %107 = vst [vmem:[#allocation2 + $0x8] sm:$0xff] %v105
  // Predicated region
  $region14: #{_lambda_.3} parent=0 // pred_check
    %p108 = pneg %p12
  $region15: #{_lambda_.3} parent=0 // pred_check_branch
    %110 = sbr.rel (%p108) target = $region17
  $region16: #{_lambda_.3} parent=0 // pred_region
    %v111 = vld [vmem:[#allocation2] sm:$0xff]
    %v112 = vld [vmem:[#allocation2 + $0x8] sm:$0xff]
    %v113 = vpack.c.bf16 %v112, %v111
    %v115 = vunpack.c.l.b16 %v113
    %v116 = vunpack.c.h.b16 %v113
    %v117 = vpack.c.b16 %v115, %v115
    %v118 = vpack.c.b16 %v116, %v116
    %121 = vst [vmem:[%s2] sm:$0xf] %v117
    %122 = vst [vmem:[%s2 + $0x4] sm:$0xf] %v118
  $region17: #{_lambda_.3} parent=0 // pred_fallthru
    _
  // Predicated region
  $region18: #{_lambda_.3} parent=0 // pred_check
    _
  $region19: #{_lambda_.3} parent=0 // pred_check_branch
    %124 = sbr.rel (0) target = $region21
  $region20: #{_lambda_.3} parent=0 // pred_region
    _
  $region21: #{_lambda_.3} parent=0 // pred_fallthru
    _
  // Predicated region
  $region22: #{_lambda_.3} parent=0 // pred_check
    _
  $region23: #{_lambda_.3} parent=0 // pred_check_branch
    %126 = sbr.rel (0) target = $region25
  $region24: #{_lambda_.3} parent=0 // pred_region
    _
  $region25: #{_lambda_.3} parent=0 // pred_fallthru
    _

// kernel: _lambda_.5
$region0: #{_lambda_.5}
  #allocation0 [shape = 'u32[]', space=smem, size = 0x4, offset = 0x4, fixed_abs, tag = 'smem constant byte address 0x4 - core index']
  #allocation1 [shape = 'u32[144,128]{1,0:T(1,128)}', space=vmem, size = 0x12000, scoped, tag = 'internal scratch']
  #allocation2 [shape = 'f32[16,64]{1,0:T(8,128)}', space=vmem, size = 0x2000, scoped, tag = 'scratch operand']
  %s0 = inlined_call_operand.vmem [shape: bf16[16,64], index: 0, kind: input, shape index: {}]
  %s1 = inlined_call_operand.vmem [shape: bf16[64,64], index: 1, kind: input, shape index: {}]
  %s2 = inlined_call_operand.hbm [shape: f32[16,64], index: 2, kind: output, shape index: {}]
  %s3 = sld [smem:[#allocation0]]
  $region26: #{_lambda_.5} parent=0
    _
  %s5 = ssub.s32 1, %s3
  %s6 = scalar_select 0, %s5, %s3
  $region1: #{_lambda_.5} parent=0
    #allocation3 [shape = 'u8[8192]{0}', space=vmem, size = 0x2000, scoped, tag = 'output window, operand 0, single buffered']
    #allocation4 [shape = 's32[1]{0}', space=sflag, size = 0x4, scoped, tag = 'scoped memory for _lambda_.5']
    %7 = vsyncpa [#allocation4], 0
    // Predicated region
    $region2: #{_lambda_.5} parent=1 // pred_check
      _
    $region3: #{_lambda_.5} parent=1 // pred_check_branch
      %9 = sbr.rel (0) target = $region5
    $region4: #{_lambda_.5} parent=1 // pred_region
      _
    $region5: #{_lambda_.5} parent=1 // pred_fallthru
      _
    // Predicated region
    $region6: #{_lambda_.5} parent=1 // pred_check
      _
    $region7: #{_lambda_.5} parent=1 // pred_check_branch
      %11 = sbr.rel (0) target = $region9
    $region8: #{_lambda_.5} parent=1 // pred_region
      _
    $region9: #{_lambda_.5} parent=1 // pred_fallthru
      _
    %p13 = scmp.eq.s32.totalorder 0, 0
    // Predicated region
    $region10: #{_lambda_.5} parent=1 // pred_check
      %p14 = pneg %p13
    $region11: #{_lambda_.5} parent=1 // pred_check_branch
      %16 = sbr.rel (%p14) target = $region13
    $region12: #{_lambda_.5} parent=1 // pred_region
      %vm17 = vcmask 523264
      %18 = vst.msk [vmem:[#allocation2] sm:$0xff] %vm17, 0.0
      %19 = vst.msk [vmem:[#allocation2 + $0x8] sm:$0xff] %vm17, 0.0
    $region13: #{_lambda_.5} parent=1 // pred_fallthru
      _
    %v20 = vld [vmem:[#allocation2] sm:$0xff]
    %v21 = vld [vmem:[#allocation2 + $0x8] sm:$0xff]
    %v22 = vld [vmem:[%s0] sm:$0xf]
    %v23 = vld [vmem:[%s0 + $0x4] sm:$0xf]
    %v24 = vld [vmem:[%s1] sm:$0xf]
    %v25 = vld [vmem:[%s1 + $0x4] sm:$0xf]
    %v26 = vld [vmem:[%s1 + $0x8] sm:$0xf]
    %v27 = vld [vmem:[%s1 + $0xc] sm:$0xf]
    %v28 = vld [vmem:[%s1 + $0x10] sm:$0xf]
    %v29 = vld [vmem:[%s1 + $0x14] sm:$0xf]
    %v30 = vld [vmem:[%s1 + $0x18] sm:$0xf]
    %v31 = vld [vmem:[%s1 + $0x1c] sm:$0xf]
    %v34 = vunpack.c.l.b16 %v22
    %v35 = vunpack.c.l.b16 %v23
    %v36 = vpack.c.b16 %v35, %v34
    %v45 = vunpack.c.l.b16 %v24
    %v46 = vunpack.c.l.b16 %v25
    %v47 = vunpack.c.l.b16 %v26
    %v48 = vunpack.c.l.b16 %v27
    %v49 = vunpack.c.l.b16 %v28
    %v50 = vunpack.c.l.b16 %v29
    %v51 = vunpack.c.l.b16 %v30
    %v52 = vunpack.c.l.b16 %v31
    %v53 = vpack.c.b16 %v46, %v45
    %v54 = vpack.c.b16 %v48, %v47
    %v55 = vpack.c.b16 %v50, %v49
    %v56 = vpack.c.b16 %v52, %v51
    %vm61 = vcmask 523264
    %v63 = vsel %vm61, %v36, 0
    %65 = vmatprep.subr.bf16.mxu0 0
    %66 = vmatpush1.bf16.msra.mxu0 0
    %67 = vmatprep.subr.bf16.mxu0 0
    %68 = vmatpush1.bf16.msra.mxu0 0
    %69 = vmatprep.subr.bf16.mxu0 0
    %70 = vmatpush1.bf16.msra.mxu0 0
    %71 = vmatprep.subr.bf16.mxu0 0
    %72 = vmatpush1.bf16.msra.mxu0 0
    %73 = vmatprep.subr.bf16.mxu0 0
    %74 = vmatpush1.bf16.msra.mxu0 %v56
    %75 = vmatprep.subr.bf16.mxu0 0
    %76 = vmatpush1.bf16.msra.mxu0 %v55
    %77 = vmatprep.subr.bf16.mxu0 0
    %78 = vmatpush1.bf16.msra.mxu0 %v54
    %79 = vmatprep.subr.bf16.mxu0 0
    %80 = vmatpush1.bf16.msra.mxu0 %v53
    %81 = vmatprep.subr.bf16.mxu0 0
    %82 = vmatpush2.bf16.msra.mxu0 0
    %83 = vmatprep.subr.bf16.mxu0 0
    %84 = vmatpush2.bf16.msra.mxu0 0
    %85 = vmatprep.subr.bf16.mxu0 0
    %86 = vmatpush2.bf16.msra.mxu0 0
    %87 = vmatprep.subr.bf16.mxu0 0
    %88 = vmatpush2.bf16.msra.mxu0 0
    %89 = vmatprep.subr.bf16.mxu0 0
    %90 = vmatpush2.bf16.msra.mxu0 0
    %91 = vmatprep.subr.bf16.mxu0 0
    %92 = vmatpush2.bf16.msra.mxu0 0
    %93 = vmatprep.subr.bf16.mxu0 0
    %94 = vmatpush2.bf16.msra.mxu0 0
    %95 = vmatprep.subr.bf16.mxu0 0
    %96 = vmatpush2.bf16.msra.mxu0 0
    %97 = vmatprep.mubr.bf16.mxu0 0
    %98 = vmatmul.mubr.bf16.gmra.mxu0 %v63
    %v99 = vpop.f32.mrf.mxu0
    %v100 = vadd.f32 0.0, %v99
    %v101 = vpop.f32.mrf.mxu0
    %v102 = vpop.f32.mrf.mxu0
    %v103 = vadd.f32 0.0, %v102
    %v104 = vpop.f32.mrf.mxu0
    %105 = vdwg.mxu0
    %v106 = vadd.f32 %v20, %v100
    %v107 = vadd.f32 %v21, %v103
    %108 = vst.msk [vmem:[#allocation2] sm:$0xff] %vm61, %v106
    %109 = vst.msk [vmem:[#allocation2 + $0x8] sm:$0xff] %vm61, %v107
    // Predicated region
    $region14: #{_lambda_.5} parent=1 // pred_check
      %p110 = pneg %p13
    $region15: #{_lambda_.5} parent=1 // pred_check_branch
      %112 = sbr.rel (%p110) target = $region17
    $region16: #{_lambda_.5} parent=1 // pred_region
      %v113 = vld [vmem:[#allocation2] sm:$0xff]
      %v114 = vld [vmem:[#allocation2 + $0x8] sm:$0xff]
      %115 = vst.msk [vmem:[#allocation3] sm:$0xff] %vm61, %v113
      %116 = vst.msk [vmem:[#allocation3 + $0x8] sm:$0xff] %vm61, %v114
    $region17: #{_lambda_.5} parent=1 // pred_fallthru
      _
    // Predicated region
    $region18: #{_lambda_.5} parent=1 // pred_check
      _
    $region19: #{_lambda_.5} parent=1 // pred_check_branch
      %118 = sbr.rel (0) target = $region21
    $region20: #{_lambda_.5} parent=1 // pred_region
      %s120 = ssub.s32 256, 256
      %121 = vsyncadd [#allocation4], %s120
      %s122 = sshll.u32 [#allocation3], 4
      %s123 = int_to_ptr.vmem [resolvable:$true] %s122
      %128 = dma.vmem_to_hbm [thread:$0]  %s123, 256, %s2, [#allocation4], 128, 128, 8
    $region21: #{_lambda_.5} parent=1 // pred_fallthru
      _
    // Predicated region
    $region22: #{_lambda_.5} parent=1 // pred_check
      _
    $region23: #{_lambda_.5} parent=1 // pred_check_branch
      %130 = sbr.rel (0) target = $region25
    $region24: #{_lambda_.5} parent=1 // pred_region
      %131 = dma.done [#allocation4], 256
    $region25: #{_lambda_.5} parent=1 // pred_fallthru
      _
    %132 = vsyncpa [#allocation4], 1

// kernel: _lambda_.4
$region0: #{_lambda_.4}
  #allocation0 [shape = 'u32[]', space=smem, size = 0x4, offset = 0x4, fixed_abs, tag = 'smem constant byte address 0x4 - core index']
  #allocation1 [shape = 'u32[144,128]{1,0:T(1,128)}', space=vmem, size = 0x12000, scoped, tag = 'internal scratch']
  #allocation2 [shape = 'f32[8,4]{1,0:T(8,128)}', space=vmem, size = 0x1000, scoped, tag = 'scratch operand']
  #allocation3 [shape = 'f32[8,4]{1,0:T(8,128)}', space=vmem, size = 0x1000, scoped, tag = 'scratch operand']
  #allocation4 [shape = 'f32[8,64]{1,0:T(8,128)}', space=vmem, size = 0x1000, scoped, tag = 'scratch operand']
  %s0 = inlined_call_operand.vmem [shape: bf16[2,8,64], index: 0, kind: input, shape index: {}]
  %s1 = inlined_call_operand.vmem [shape: bf16[2,8,32], index: 1, kind: input, shape index: {}]
  %s2 = inlined_call_operand.vmem [shape: bf16[2,8,32], index: 2, kind: input, shape index: {}]
  %s3 = inlined_call_operand.vmem [shape: bf16[2,8,64], index: 3, kind: output, shape index: {}]
  %s4 = sld [smem:[#allocation0]]
  $region57: #{_lambda_.4} parent=0
    _
  %s6 = ssub.s32 1, %s4
  %s7 = scalar_select 0, %s6, %s4
  loop: start=0, step=1, limit=4
  $region2: #{_lambda_.4} parent=0 // loop_pre_header
    _
  $region3: #{_lambda_.4} parent=0 // loop_header
    %s9 = sphi 0, %s13
    %p10 = scmp.ge.s32.totalorder %s9, 4
    %s16 = sphi 0, %s35
    %s17 = sphi 0, %s31
    %s18 = sphi 0, %s27
    %s19 = sphi 0, %s16
    %s20 = sphi 0, %s17
    %s21 = sphi 0, %s18
    %s22 = sphi 0, %s19
    %s23 = sphi 0, %s20
    %s24 = sphi 0, %s21
    %s40 = sphi 0, %s42
    %s43 = sphi 0, %s40
    %s44 = sphi 0, %s43
    %s60 = sphi 0, %s44
    %s72 = sphi 0, %s74
    %s75 = sphi 0, %s72
    %s76 = sphi 0, %s75
    %s92 = sphi 0, %s76
    %s104 = sphi 0, %s106
    %s107 = sphi 0, %s104
    %s108 = sphi 0, %s107
    %s124 = sphi 0, %s108
    %s132 = sphi 0, %s134
    %s135 = sphi 0, %s132
    %s136 = sphi 0, %s135
    %s152 = sphi 0, %s136
  $region4: #{_lambda_.4} parent=0 // loop_header_branch
    %12 = sbr.rel (%p10) target = $region8
  $region5: #{_lambda_.4} parent=0 // loop_body
    %s14 = ssub.s32 %s9, 1
    %s15 = ssub.s32 %s9, 2
    %s25 = sadd.s32 1, %s18
    %p26 = scmp.ge.s32.totalorder %s25, 1
    %s27 = scalar_select %p26, 0, %s25
    %s28 = sadd.s32 1, %s17
    %s29 = scalar_select %p26, %s28, %s17
    %p30 = scmp.ge.s32.totalorder %s29, 1
    %s31 = scalar_select %p30, 0, %s29
    %s32 = sadd.s32 1, %s16
    %s33 = scalar_select %p30, %s32, %s16
    %p34 = scmp.ge.s32.totalorder %s33, 2
    %s35 = scalar_select %p34, 0, %s33
    %s36 = ssub.s32 %s16, %s35
    %s37 = ssub.s32 %s17, %s31
    %s38 = sor.u32 %s36, %s37
    %p39 = scmp.eq.s32.totalorder %s38, 0
    %s41 = sadd.s32 %s40, 1
    %s42 = scalar_select %p39, %s40, %s41
    %p45 = pneg %p39
    %p46 = scmp.eq.s32.totalorder %s9, 1
    %p47 = por %p45, %p46
    %p48 = scmp.ne.s32.totalorder %s40, %s43
    %p49 = scmp.eq.s32.totalorder %s9, 0
    %p50 = por %p48, %p49
    %p51 = scmp.ne.s32.totalorder %s40, %s43
    %p52 = scmp.eq.s32.totalorder %s14, 1
    %p53 = por %p51, %p52
    %p54 = scmp.ne.s32.totalorder %s43, %s44
    %p55 = scmp.eq.s32.totalorder %s14, 0
    %p56 = por %p54, %p55
    %p57 = scmp.ne.s32.totalorder %s43, %s44
    %p58 = scmp.eq.s32.totalorder %s15, 1
    %p59 = por %p57, %p58
    %p61 = scmp.ne.s32.totalorder %s44, %s60
    %p62 = scmp.eq.s32.totalorder %s15, 0
    %p63 = por %p61, %p62
    %p64 = scmp.lt.s32.totalorder %s18, %s17
    %s65 = scalar_select %p64, %s18, %s17
    %p66 = scmp.lt.s32.totalorder %s27, %s31
    %s67 = scalar_select %p66, %s27, %s31
    %s68 = ssub.s32 %s16, %s35
    %s69 = ssub.s32 %s65, %s67
    %s70 = sor.u32 %s68, %s69
    %p71 = scmp.eq.s32.totalorder %s70, 0
    %s73 = sadd.s32 %s72, 1
    %s74 = scalar_select %p71, %s72, %s73
    %p77 = pneg %p71
    %p78 = scmp.eq.s32.totalorder %s9, 1
    %p79 = por %p77, %p78
    %p80 = scmp.ne.s32.totalorder %s72, %s75
    %p81 = scmp.eq.s32.totalorder %s9, 0
    %p82 = por %p80, %p81
    %p83 = scmp.ne.s32.totalorder %s72, %s75
    %p84 = scmp.eq.s32.totalorder %s14, 1
    %p85 = por %p83, %p84
    %p86 = scmp.ne.s32.totalorder %s75, %s76
    %p87 = scmp.eq.s32.totalorder %s14, 0
    %p88 = por %p86, %p87
    %p89 = scmp.ne.s32.totalorder %s75, %s76
    %p90 = scmp.eq.s32.totalorder %s15, 1
    %p91 = por %p89, %p90
    %p93 = scmp.ne.s32.totalorder %s76, %s92
    %p94 = scmp.eq.s32.totalorder %s15, 0
    %p95 = por %p93, %p94
    %p96 = scmp.lt.s32.totalorder %s18, %s17
    %s97 = scalar_select %p96, %s18, %s17
    %p98 = scmp.lt.s32.totalorder %s27, %s31
    %s99 = scalar_select %p98, %s27, %s31
    %s100 = ssub.s32 %s16, %s35
    %s101 = ssub.s32 %s97, %s99
    %s102 = sor.u32 %s100, %s101
    %p103 = scmp.eq.s32.totalorder %s102, 0
    %s105 = sadd.s32 %s104, 1
    %s106 = scalar_select %p103, %s104, %s105
    %p109 = pneg %p103
    %p110 = scmp.eq.s32.totalorder %s9, 1
    %p111 = por %p109, %p110
    %p112 = scmp.ne.s32.totalorder %s104, %s107
    %p113 = scmp.eq.s32.totalorder %s9, 0
    %p114 = por %p112, %p113
    %p115 = scmp.ne.s32.totalorder %s104, %s107
    %p116 = scmp.eq.s32.totalorder %s14, 1
    %p117 = por %p115, %p116
    %p118 = scmp.ne.s32.totalorder %s107, %s108
    %p119 = scmp.eq.s32.totalorder %s14, 0
    %p120 = por %p118, %p119
    %p121 = scmp.ne.s32.totalorder %s107, %s108
    %p122 = scmp.eq.s32.totalorder %s15, 1
    %p123 = por %p121, %p122
    %p125 = scmp.ne.s32.totalorder %s108, %s124
    %p126 = scmp.eq.s32.totalorder %s15, 0
    %p127 = por %p125, %p126
    %s128 = ssub.s32 %s16, %s35
    %s129 = ssub.s32 %s17, %s31
    %s130 = sor.u32 %s128, %s129
    %p131 = scmp.eq.s32.totalorder %s130, 0
    %s133 = sadd.s32 %s132, 1
    %s134 = scalar_select %p131, %s132, %s133
    %p137 = pneg %p131
    %p138 = scmp.eq.s32.totalorder %s9, 1
    %p139 = por %p137, %p138
    %p140 = scmp.ne.s32.totalorder %s132, %s135
    %p141 = scmp.eq.s32.totalorder %s9, 0
    %p142 = por %p140, %p141
    %p143 = scmp.ne.s32.totalorder %s132, %s135
    %p144 = scmp.eq.s32.totalorder %s14, 1
    %p145 = por %p143, %p144
    %p146 = scmp.ne.s32.totalorder %s135, %s136
    %p147 = scmp.eq.s32.totalorder %s14, 0
    %p148 = por %p146, %p147
    %p149 = scmp.ne.s32.totalorder %s135, %s136
    %p150 = scmp.eq.s32.totalorder %s15, 1
    %p151 = por %p149, %p150
    %p153 = scmp.ne.s32.totalorder %s136, %s152
    %p154 = scmp.eq.s32.totalorder %s15, 0
    %p155 = por %p153, %p154
    %p156 = scmp.le.s32.totalorder 1, %s9
    %p157 = scmp.lt.s32.totalorder %s9, 3
    %p158 = pnand %p156, %p157
    %p159 = pneg %p158
    // Predicated region
    $region9: #{_lambda_.4} parent=5 // pred_check
      _
    $region10: #{_lambda_.4} parent=5 // pred_check_branch
      %161 = sbr.rel (%p158) target = $region12
    $region11: #{_lambda_.4} parent=5 // pred_region
      %s162 = ssub.s32 %s9, 1
    $region12: #{_lambda_.4} parent=5 // pred_fallthru
      _
    %p163 = scmp.lt.s32.totalorder %s9, 2
    // Predicated region
    $region13: #{_lambda_.4} parent=5 // pred_check
      %p164 = pneg %p163
    $region14: #{_lambda_.4} parent=5 // pred_check_branch
      %166 = sbr.rel (%p164) target = $region16
    $region15: #{_lambda_.4} parent=5 // pred_region
      // Predicated region
      $region17: #{_lambda_.4} parent=15 // pred_check
        %p167 = pneg %p50
      $region18: #{_lambda_.4} parent=15 // pred_check_branch
        %169 = sbr.rel (%p167) target = $region20
      $region19: #{_lambda_.4} parent=15 // pred_region
        %p170 = scmp.lt.s32.totalorder %s16, 1
        %s171 = scalar_select %p170, %s16, 1
        %p172 = scmp.lt.s32.totalorder %s17, 0
        %s173 = scalar_select %p172, %s17, 0
        %s174 = sadd.s32 %s173, %s171
        %s175 = smul.addr %s174, 4
        %s176 = scalar_lea.vmem %s0, %s175
      $region20: #{_lambda_.4} parent=15 // pred_fallthru
        _
      // Predicated region
      $region21: #{_lambda_.4} parent=15 // pred_check
        %p177 = pneg %p82
      $region22: #{_lambda_.4} parent=15 // pred_check_branch
        %179 = sbr.rel (%p177) target = $region24
      $region23: #{_lambda_.4} parent=15 // pred_region
        %p180 = scmp.lt.s32.totalorder %s18, %s17
        %s181 = scalar_select %p180, %s18, %s17
        %p182 = scmp.lt.s32.totalorder %s16, 1
        %s183 = scalar_select %p182, %s16, 1
        %p184 = scmp.lt.s32.totalorder %s181, 0
        %s185 = scalar_select %p184, %s181, 0
        %s186 = sadd.s32 %s185, %s183
        %s187 = smul.addr %s186, 4
        %s188 = scalar_lea.vmem %s1, %s187
        %p189 = scmp.lt.s32.totalorder %s18, %s17
        %s190 = scalar_select %p189, %s18, %s17
      $region24: #{_lambda_.4} parent=15 // pred_fallthru
        _
      // Predicated region
      $region25: #{_lambda_.4} parent=15 // pred_check
        %p191 = pneg %p114
      $region26: #{_lambda_.4} parent=15 // pred_check_branch
        %193 = sbr.rel (%p191) target = $region28
      $region27: #{_lambda_.4} parent=15 // pred_region
        %p194 = scmp.lt.s32.totalorder %s18, %s17
        %s195 = scalar_select %p194, %s18, %s17
        %p196 = scmp.lt.s32.totalorder %s16, 1
        %s197 = scalar_select %p196, %s16, 1
        %p198 = scmp.lt.s32.totalorder %s195, 0
        %s199 = scalar_select %p198, %s195, 0
        %s200 = sadd.s32 %s199, %s197
        %s201 = smul.addr %s200, 4
        %s202 = scalar_lea.vmem %s2, %s201
        %p203 = scmp.lt.s32.totalorder %s18, %s17
        %s204 = scalar_select %p203, %s18, %s17
      $region28: #{_lambda_.4} parent=15 // pred_fallthru
        _
    $region16: #{_lambda_.4} parent=5 // pred_fallthru
      _
    %p205 = scmp.le.s32.totalorder 1, %s9
    %p206 = scmp.lt.s32.totalorder %s9, 3
    %p207 = pnand %p205, %p206
    %p208 = pneg %p207
    // Predicated region
    $region29: #{_lambda_.4} parent=5 // pred_check
      _
    $region30: #{_lambda_.4} parent=5 // pred_check_branch
      %210 = sbr.rel (%p207) target = $region32
    $region31: #{_lambda_.4} parent=5 // pred_region
      %s211 = ssub.s32 %s9, 1
      %p212 = scmp.lt.s32.totalorder %s19, 1
      %s213 = scalar_select %p212, %s19, 1
      %p214 = scmp.lt.s32.totalorder %s20, 0
      %s215 = scalar_select %p214, %s20, 0
      %s216 = sadd.s32 %s215, %s213
      %s217 = smul.addr %s216, 4
      %s218 = scalar_lea.vmem %s0, %s217
      %p219 = pneg %p56
      %p220 = pneg %p53
      %p221 = scmp.lt.s32.totalorder %s21, %s20
      %s222 = scalar_select %p221, %s21, %s20
      %p223 = scmp.lt.s32.totalorder %s19, 1
      %s224 = scalar_select %p223, %s19, 1
      %p225 = scmp.lt.s32.totalorder %s222, 0
      %s226 = scalar_select %p225, %s222, 0
      %s227 = sadd.s32 %s226, %s224
      %s228 = smul.addr %s227, 4
      %s229 = scalar_lea.vmem %s1, %s228
      %p230 = pneg %p88
      %p231 = pneg %p85
      %p232 = scmp.lt.s32.totalorder %s21, %s20
      %s233 = scalar_select %p232, %s21, %s20
      %p234 = scmp.lt.s32.totalorder %s19, 1
      %s235 = scalar_select %p234, %s19, 1
      %p236 = scmp.lt.s32.totalorder %s233, 0
      %s237 = scalar_select %p236, %s233, 0
      %s238 = sadd.s32 %s237, %s235
      %s239 = smul.addr %s238, 4
      %s240 = scalar_lea.vmem %s2, %s239
      %p241 = pneg %p120
      %p242 = pneg %p117
      %p243 = pneg %p148
      %p244 = pneg %p145
      %p245 = scmp.lt.s32.totalorder %s19, 1
      %s246 = scalar_select %p245, %s19, 1
      %p247 = scmp.lt.s32.totalorder %s20, 0
      %s248 = scalar_select %p247, %s20, 0
      %s249 = sadd.s32 %s248, %s246
      %s250 = smul.addr %s249, 4
      %s251 = scalar_lea.vmem %s3, %s250
      %p252 = scmp.lt.s32.totalorder %s19, 1
      %s253 = scalar_select %p252, %s19, 1
      %p254 = scmp.lt.s32.totalorder %s20, 0
      %s255 = scalar_select %p254, %s20, 0
      %s256 = sadd.s32 %s255, %s253
      %s257 = smul.addr %s256, 4
      %s258 = scalar_lea.vmem %s0, %s257
      %p259 = scmp.lt.s32.totalorder %s21, %s20
      %s260 = scalar_select %p259, %s21, %s20
      %p261 = scmp.lt.s32.totalorder %s19, 1
      %s262 = scalar_select %p261, %s19, 1
      %p263 = scmp.lt.s32.totalorder %s260, 0
      %s264 = scalar_select %p263, %s260, 0
      %s265 = sadd.s32 %s264, %s262
      %s266 = smul.addr %s265, 4
      %s267 = scalar_lea.vmem %s1, %s266
      %p268 = scmp.lt.s32.totalorder %s21, %s20
      %s269 = scalar_select %p268, %s21, %s20
      %p270 = scmp.lt.s32.totalorder %s21, %s20
      %s271 = scalar_select %p270, %s21, %s20
      %p272 = scmp.lt.s32.totalorder %s19, 1
      %s273 = scalar_select %p272, %s19, 1
      %p274 = scmp.lt.s32.totalorder %s271, 0
      %s275 = scalar_select %p274, %s271, 0
      %s276 = sadd.s32 %s275, %s273
      %s277 = smul.addr %s276, 4
      %s278 = scalar_lea.vmem %s2, %s277
      %p279 = scmp.lt.s32.totalorder %s21, %s20
      %s280 = scalar_select %p279, %s21, %s20
      %p281 = scmp.lt.s32.totalorder %s19, 1
      %s282 = scalar_select %p281, %s19, 1
      %p283 = scmp.lt.s32.totalorder %s20, 0
      %s284 = scalar_select %p283, %s20, 0
      %s285 = sadd.s32 %s284, %s282
      %s286 = smul.addr %s285, 4
      %s287 = scalar_lea.vmem %s3, %s286
      %p289 = scmp.eq.s32.totalorder %s21, 0
      // Predicated region
      $region33: #{_lambda_.4} parent=31 // pred_check
        %p290 = pneg %p289
      $region34: #{_lambda_.4} parent=31 // pred_check_branch
        %292 = sbr.rel (%p290) target = $region36
      $region35: #{_lambda_.4} parent=31 // pred_region
        %vm293 = vcmask 31744
        %294 = vst.msk [vmem:[#allocation2] sm:$0xff] %vm293, -inf
        %295 = vst.msk [vmem:[#allocation3] sm:$0xff] %vm293, 0.0
        %vm296 = vcmask 523264
        %297 = vst.msk [vmem:[#allocation4] sm:$0xff] %vm296, 0.0
      $region36: #{_lambda_.4} parent=31 // pred_fallthru
        _
      %p298 = scmp.lt.s32.totalorder %s21, %s20
      // Predicated region
      $region37: #{_lambda_.4} parent=31 // pred_check
        %p299 = pneg %p298
      $region38: #{_lambda_.4} parent=31 // pred_check_branch
        %301 = sbr.rel (%p299) target = $region40
      $region39: #{_lambda_.4} parent=31 // pred_region
        %v302 = vld [vmem:[%s258] sm:$0xf]
        %v303 = vld [vmem:[%s267] sm:$0xf]
        %v304 = vld [vmem:[%s278] sm:$0xf]
        %vm305 = vcmask 130048
        %v307 = vsel %vm305, %v302, 0
        %v310 = vsel %vm305, %v303, 0
        %312 = vmatprep.subr.bf16.mxu0 0
        %313 = vmatpush1.bf16.xpose.msra.mxu0 0
        %314 = vmatprep.subr.bf16.mxu0 0
        %315 = vmatpush1.bf16.xpose.msra.mxu0 0
        %316 = vmatprep.subr.bf16.mxu0 0
        %317 = vmatpush1.bf16.xpose.msra.mxu0 0
        %318 = vmatprep.subr.bf16.mxu0 0
        %319 = vmatpush1.bf16.xpose.msra.mxu0 0
        %320 = vmatprep.subr.bf16.mxu0 0
        %321 = vmatpush1.bf16.xpose.msra.mxu0 0
        %322 = vmatprep.subr.bf16.mxu0 0
        %323 = vmatpush1.bf16.xpose.msra.mxu0 0
        %324 = vmatprep.subr.bf16.mxu0 0
        %325 = vmatpush1.bf16.xpose.msra.mxu0 0
        %326 = vmatprep.subr.bf16.mxu0 0
        %327 = vmatpush1.bf16.xpose.msra.mxu0 %v310
        %328 = vmatprep.subr.bf16.mxu0 0
        %329 = vmatpush2.bf16.xpose.msra.mxu0 0
        %330 = vmatprep.subr.bf16.mxu0 0
        %331 = vmatpush2.bf16.xpose.msra.mxu0 0
        %332 = vmatprep.subr.bf16.mxu0 0
        %333 = vmatpush2.bf16.xpose.msra.mxu0 0
        %334 = vmatprep.subr.bf16.mxu0 0
        %335 = vmatpush2.bf16.xpose.msra.mxu0 0
        %336 = vmatprep.subr.bf16.mxu0 0
        %337 = vmatpush2.bf16.xpose.msra.mxu0 0
        %338 = vmatprep.subr.bf16.mxu0 0
        %339 = vmatpush2.bf16.xpose.msra.mxu0 0
        %340 = vmatprep.subr.bf16.mxu0 0
        %341 = vmatpush2.bf16.xpose.msra.mxu0 0
        %342 = vmatprep.subr.bf16.mxu0 0
        %343 = vmatpush2.bf16.xpose.msra.mxu0 0
        %344 = vmatprep.mubr.bf16.mxu0 0
        %345 = vmatmul.mubr.bf16.gmra.mxu0 %v307
        %v346 = vpop.f32.mrf.mxu0
        %v347 = vadd.f32 0.0, %v346
        %v348 = vpop.f32.mrf.mxu0
        %v349 = vpop.f32.mrf.mxu0
        %v350 = vpop.f32.mrf.mxu0
        %351 = vdwg.mxu0
        %v352 = vmul.f32 %v347, 0.25
        %v353 = vld [vmem:[#allocation2] sm:$0xff]
        %vm354 = vcmask 64512
        %v355 = vsel %vm354, %v352, -inf
        %356 = vmax.xlane.f32.xlu0 %v355
        %v357 = vpop.xlane.xlu0 %356
        %v358 = vmax.f32 %v353, %v357
        %v359 = vsub.f32 %v353, %v358
        %v360 = vmul.f32 %v359, 1.442695
        %v361 = vpow.pop %v360
        %363 = vset.pattern.permute.xlu0 0
        %364 = vperm.xlu0 %363, %v358
        %v365 = vpop.permute.xlu0 %364
        %v367 = vsub.f32 %v352, %v365
        %v368 = vmul.f32 %v367, 1.442695
        %v369 = vpow.pop %v368
        %v370 = vld [vmem:[#allocation3] sm:$0xff]
        %v371 = vmul.f32 %v361, %v370
        %v372 = vsel %vm354, %v369, 0.0
        %373 = vadd.xlane.f32.xlu0 %v372
        %v374 = vpop.xlane.xlu0 %373
        %v375 = vadd.f32 %v371, %v374
        %vm376 = vcmask 7168
        %377 = vst.msk [vmem:[#allocation3] sm:$0xff] %vm376, %v375
        %v378 = vld [vmem:[#allocation4] sm:$0xff]
        %380 = vset.pattern.permute.xlu0 0
        %381 = vperm.xlu0 %380, %v361
        %v382 = vpop.permute.xlu0 %381
        %v384 = vmul.f32 %v382, %v378
        %v385 = vpack.c.bf16 %v369, %v369
        %v387 = vsel %vm354, %v385, 0
        %vm389 = vcmask 1043456
        %v391 = vsel %vm389, %v304, 0
        %393 = vmatprep.subr.bf16.mxu0 0
        %394 = vmatpush1.bf16.msra.mxu0 0
        %395 = vmatprep.subr.bf16.mxu0 0
        %396 = vmatpush1.bf16.msra.mxu0 0
        %397 = vmatprep.subr.bf16.mxu0 0
        %398 = vmatpush1.bf16.msra.mxu0 0
        %399 = vmatprep.subr.bf16.mxu0 0
        %400 = vmatpush1.bf16.msra.mxu0 0
        %401 = vmatprep.subr.bf16.mxu0 0
        %402 = vmatpush1.bf16.msra.mxu0 0
        %403 = vmatprep.subr.bf16.mxu0 0
        %404 = vmatpush1.bf16.msra.mxu0 0
        %405 = vmatprep.subr.bf16.mxu0 0
        %406 = vmatpush1.bf16.msra.mxu0 0
        %407 = vmatprep.subr.bf16.mxu0 0
        %408 = vmatpush1.bf16.msra.mxu0 %v391
        %409 = vmatprep.subr.bf16.mxu0 0
        %410 = vmatpush2.bf16.msra.mxu0 0
        %411 = vmatprep.subr.bf16.mxu0 0
        %412 = vmatpush2.bf16.msra.mxu0 0
        %413 = vmatprep.subr.bf16.mxu0 0
        %414 = vmatpush2.bf16.msra.mxu0 0
        %415 = vmatprep.subr.bf16.mxu0 0
        %416 = vmatpush2.bf16.msra.mxu0 0
        %417 = vmatprep.subr.bf16.mxu0 0
        %418 = vmatpush2.bf16.msra.mxu0 0
        %419 = vmatprep.subr.bf16.mxu0 0
        %420 = vmatpush2.bf16.msra.mxu0 0
        %421 = vmatprep.subr.bf16.mxu0 0
        %422 = vmatpush2.bf16.msra.mxu0 0
        %423 = vmatprep.subr.bf16.mxu0 0
        %424 = vmatpush2.bf16.msra.mxu0 0
        %425 = vmatprep.mubr.bf16.mxu0 0
        %426 = vmatmul.mubr.bf16.gmra.mxu0 %v387
        %v427 = vpop.f32.mrf.mxu0
        %v428 = vadd.f32 0.0, %v427
        %v429 = vpop.f32.mrf.mxu0
        %v430 = vpop.f32.mrf.mxu0
        %v431 = vpop.f32.mrf.mxu0
        %432 = vdwg.mxu0
        %v433 = vadd.f32 %v384, %v428
        %434 = vst.msk [vmem:[#allocation4] sm:$0xff] %vm305, %v433
        %435 = vst.msk [vmem:[#allocation2] sm:$0xff] %vm376, %v358
        %v437 = vunpack.c.l.b16 %v302
        %v438 = vpack.c.b16 %v437, %v437
        %439 = vrot.lane.b32.xlu0 %v438, 112
        %v440 = vpop.permute.xlu0 %439
        %v442 = vsel %vm305, %v440, 0
        %444 = vmatprep.subr.bf16.mxu0 0
        %445 = vmatpush1.bf16.xpose.msra.mxu0 0
        %446 = vmatprep.subr.bf16.mxu0 0
        %447 = vmatpush1.bf16.xpose.msra.mxu0 0
        %448 = vmatprep.subr.bf16.mxu0 0
        %449 = vmatpush1.bf16.xpose.msra.mxu0 0
        %450 = vmatprep.subr.bf16.mxu0 0
        %451 = vmatpush1.bf16.xpose.msra.mxu0 0
        %452 = vmatprep.subr.bf16.mxu0 0
        %453 = vmatpush1.bf16.xpose.msra.mxu0 0
        %454 = vmatprep.subr.bf16.mxu0 0
        %455 = vmatpush1.bf16.xpose.msra.mxu0 0
        %456 = vmatprep.subr.bf16.mxu0 0
        %457 = vmatpush1.bf16.xpose.msra.mxu0 0
        %458 = vmatprep.subr.bf16.mxu0 0
        %459 = vmatpush1.bf16.xpose.msra.mxu0 %v310
        %460 = vmatprep.subr.bf16.mxu0 0
        %461 = vmatpush2.bf16.xpose.msra.mxu0 0
        %462 = vmatprep.subr.bf16.mxu0 0
        %463 = vmatpush2.bf16.xpose.msra.mxu0 0
        %464 = vmatprep.subr.bf16.mxu0 0
        %465 = vmatpush2.bf16.xpose.msra.mxu0 0
        %466 = vmatprep.subr.bf16.mxu0 0
        %467 = vmatpush2.bf16.xpose.msra.mxu0 0
        %468 = vmatprep.subr.bf16.mxu0 0
        %469 = vmatpush2.bf16.xpose.msra.mxu0 0
        %470 = vmatprep.subr.bf16.mxu0 0
        %471 = vmatpush2.bf16.xpose.msra.mxu0 0
        %472 = vmatprep.subr.bf16.mxu0 0
        %473 = vmatpush2.bf16.xpose.msra.mxu0 0
        %474 = vmatprep.subr.bf16.mxu0 0
        %475 = vmatpush2.bf16.xpose.msra.mxu0 0
        %476 = vmatprep.mubr.bf16.mxu0 0
        %477 = vmatmul.mubr.bf16.gmra.mxu0 %v442
        %v478 = vpop.f32.mrf.mxu0
        %v479 = vadd.f32 0.0, %v478
        %v480 = vpop.f32.mrf.mxu0
        %v481 = vpop.f32.mrf.mxu0
        %v482 = vpop.f32.mrf.mxu0
        %483 = vdwg.mxu0
        %v484 = vmul.f32 %v479, 0.25
        %v485 = vld [vmem:[#allocation2] sm:$0xff]
        %v486 = vsel %vm354, %v484, -inf
        %487 = vmax.xlane.f32.xlu0 %v486
        %v488 = vpop.xlane.xlu0 %487
        %v489 = vmax.f32 %v485, %v488
        %v490 = vsub.f32 %v485, %v489
        %v491 = vmul.f32 %v490, 1.442695
        %v492 = vpow.pop %v491
        %494 = vset.pattern.permute.xlu0 1
        %495 = vperm.xlu0 %494, %v489
        %v496 = vpop.permute.xlu0 %495
        %v498 = vsub.f32 %v484, %v496
        %v499 = vmul.f32 %v498, 1.442695
        %v500 = vpow.pop %v499
        %v501 = vld [vmem:[#allocation3] sm:$0xff]
        %v502 = vmul.f32 %v492, %v501
        %v503 = vsel %vm354, %v500, 0.0
        %504 = vadd.xlane.f32.xlu0 %v503
        %v505 = vpop.xlane.xlu0 %504
        %v506 = vadd.f32 %v502, %v505
        %vm507 = vcmask 15368
        %508 = vst.msk [vmem:[#allocation3] sm:$0xff] %vm507, %v506
        %v509 = vld [vmem:[#allocation4] sm:$0xff]
        %511 = vset.pattern.permute.xlu0 1
        %512 = vperm.xlu0 %511, %v492
        %v513 = vpop.permute.xlu0 %512
        %v515 = vmul.f32 %v513, %v509
        %v516 = vpack.c.bf16 %v500, %v500
        %v518 = vsel %vm354, %v516, 0
        %520 = vmatprep.subr.bf16.mxu0 0
        %521 = vmatpush1.bf16.msra.mxu0 0
        %522 = vmatprep.subr.bf16.mxu0 0
        %523 = vmatpush1.bf16.msra.mxu0 0
        %524 = vmatprep.subr.bf16.mxu0 0
        %525 = vmatpush1.bf16.msra.mxu0 0
        %526 = vmatprep.subr.bf16.mxu0 0
        %527 = vmatpush1.bf16.msra.mxu0 0
        %528 = vmatprep.subr.bf16.mxu0 0
        %529 = vmatpush1.bf16.msra.mxu0 0
        %530 = vmatprep.subr.bf16.mxu0 0
        %531 = vmatpush1.bf16.msra.mxu0 0
        %532 = vmatprep.subr.bf16.mxu0 0
        %533 = vmatpush1.bf16.msra.mxu0 0
        %534 = vmatprep.subr.bf16.mxu0 0
        %535 = vmatpush1.bf16.msra.mxu0 %v391
        %536 = vmatprep.subr.bf16.mxu0 0
        %537 = vmatpush2.bf16.msra.mxu0 0
        %538 = vmatprep.subr.bf16.mxu0 0
        %539 = vmatpush2.bf16.msra.mxu0 0
        %540 = vmatprep.subr.bf16.mxu0 0
        %541 = vmatpush2.bf16.msra.mxu0 0
        %542 = vmatprep.subr.bf16.mxu0 0
        %543 = vmatpush2.bf16.msra.mxu0 0
        %544 = vmatprep.subr.bf16.mxu0 0
        %545 = vmatpush2.bf16.msra.mxu0 0
        %546 = vmatprep.subr.bf16.mxu0 0
        %547 = vmatpush2.bf16.msra.mxu0 0
        %548 = vmatprep.subr.bf16.mxu0 0
        %549 = vmatpush2.bf16.msra.mxu0 0
        %550 = vmatprep.subr.bf16.mxu0 0
        %551 = vmatpush2.bf16.msra.mxu0 0
        %552 = vmatprep.mubr.bf16.mxu0 0
        %553 = vmatmul.mubr.bf16.gmra.mxu0 %v518
        %v554 = vpop.f32.mrf.mxu0
        %v555 = vadd.f32 0.0, %v554
        %v556 = vpop.f32.mrf.mxu0
        %v557 = vpop.f32.mrf.mxu0
        %v558 = vpop.f32.mrf.mxu0
        %559 = vdwg.mxu0
        %561 = vrot.lane.b32.xlu0 %v555, 16
        %v562 = vpop.permute.xlu0 %561
        %v564 = vadd.f32 %v515, %v562
        %vm565 = vcmask 261248
        %566 = vst.msk [vmem:[#allocation4] sm:$0xff] %vm565, %v564
        %567 = vst.msk [vmem:[#allocation2] sm:$0xff] %vm507, %v489
        %568 = vrot.lane.b32.xlu0 %v438, 96
        %v569 = vpop.permute.xlu0 %568
        %v571 = vunpack.c.l.b16 %v303
        %v572 = vpack.c.b16 %v571, %v571
        %573 = vrot.lane.b32.xlu0 %v572, 112
        %v574 = vpop.permute.xlu0 %573
        %v576 = vsel %vm305, %v569, 0
        %v579 = vsel %vm305, %v574, 0
        %581 = vmatprep.subr.bf16.mxu0 0
        %582 = vmatpush1.bf16.xpose.msra.mxu0 0
        %583 = vmatprep.subr.bf16.mxu0 0
        %584 = vmatpush1.bf16.xpose.msra.mxu0 0
        %585 = vmatprep.subr.bf16.mxu0 0
        %586 = vmatpush1.bf16.xpose.msra.mxu0 0
        %587 = vmatprep.subr.bf16.mxu0 0
        %588 = vmatpush1.bf16.xpose.msra.mxu0 0
        %589 = vmatprep.subr.bf16.mxu0 0
        %590 = vmatpush1.bf16.xpose.msra.mxu0 0
        %591 = vmatprep.subr.bf16.mxu0 0
        %592 = vmatpush1.bf16.xpose.msra.mxu0 0
        %593 = vmatprep.subr.bf16.mxu0 0
        %594 = vmatpush1.bf16.xpose.msra.mxu0 0
        %595 = vmatprep.subr.bf16.mxu0 0
        %596 = vmatpush1.bf16.xpose.msra.mxu0 %v579
        %597 = vmatprep.subr.bf16.mxu0 0
        %598 = vmatpush2.bf16.xpose.msra.mxu0 0
        %599 = vmatprep.subr.bf16.mxu0 0
        %600 = vmatpush2.bf16.xpose.msra.mxu0 0
        %601 = vmatprep.subr.bf16.mxu0 0
        %602 = vmatpush2.bf16.xpose.msra.mxu0 0
        %603 = vmatprep.subr.bf16.mxu0 0
        %604 = vmatpush2.bf16.xpose.msra.mxu0 0
        %605 = vmatprep.subr.bf16.mxu0 0
        %606 = vmatpush2.bf16.xpose.msra.mxu0 0
        %607 = vmatprep.subr.bf16.mxu0 0
        %608 = vmatpush2.bf16.xpose.msra.mxu0 0
        %609 = vmatprep.subr.bf16.mxu0 0
        %610 = vmatpush2.bf16.xpose.msra.mxu0 0
        %611 = vmatprep.subr.bf16.mxu0 0
        %612 = vmatpush2.bf16.xpose.msra.mxu0 0
        %613 = vmatprep.mubr.bf16.mxu0 0
        %614 = vmatmul.mubr.bf16.gmra.mxu0 %v576
        %v615 = vpop.f32.mrf.mxu0
        %v616 = vadd.f32 0.0, %v615
        %v617 = vpop.f32.mrf.mxu0
        %v618 = vpop.f32.mrf.mxu0
        %v619 = vpop.f32.mrf.mxu0
        %620 = vdwg.mxu0
        %v621 = vmul.f32 %v616, 0.25
        %v622 = vld [vmem:[#allocation2] sm:$0xff]
        %v623 = vsel %vm354, %v621, -inf
        %624 = vmax.xlane.f32.xlu0 %v623
        %v625 = vpop.xlane.xlu0 %624
        %v626 = vmax.f32 %v622, %v625
        %v627 = vsub.f32 %v622, %v626
        %v628 = vmul.f32 %v627, 1.442695
        %v629 = vpow.pop %v628
        %631 = vset.pattern.permute.xlu0 2
        %632 = vperm.xlu0 %631, %v626
        %v633 = vpop.permute.xlu0 %632
        %v635 = vsub.f32 %v621, %v633
        %v636 = vmul.f32 %v635, 1.442695
        %v637 = vpow.pop %v636
        %v638 = vld [vmem:[#allocation3] sm:$0xff]
        %v639 = vmul.f32 %v629, %v638
        %v640 = vsel %vm354, %v637, 0.0
        %641 = vadd.xlane.f32.xlu0 %v640
        %v642 = vpop.xlane.xlu0 %641
        %v643 = vadd.f32 %v639, %v642
        %vm644 = vcmask 23568
        %645 = vst.msk [vmem:[#allocation3] sm:$0xff] %vm644, %v643
        %v646 = vld [vmem:[#allocation4] sm:$0xff]
        %648 = vset.pattern.permute.xlu0 2
        %649 = vperm.xlu0 %648, %v629
        %v650 = vpop.permute.xlu0 %649
        %v652 = vmul.f32 %v650, %v646
        %v653 = vpack.c.bf16 %v637, %v637
        %v655 = vunpack.c.l.b16 %v304
        %v656 = vpack.c.b16 %v655, %v655
        %657 = vrot.lane.b32.xlu0 %v656, 112
        %v658 = vpop.permute.xlu0 %657
        %v660 = vsel %vm354, %v653, 0
        %v663 = vsel %vm389, %v658, 0
        %665 = vmatprep.subr.bf16.mxu0 0
        %666 = vmatpush1.bf16.msra.mxu0 0
        %667 = vmatprep.subr.bf16.mxu0 0
        %668 = vmatpush1.bf16.msra.mxu0 0
        %669 = vmatprep.subr.bf16.mxu0 0
        %670 = vmatpush1.bf16.msra.mxu0 0
        %671 = vmatprep.subr.bf16.mxu0 0
        %672 = vmatpush1.bf16.msra.mxu0 0
        %673 = vmatprep.subr.bf16.mxu0 0
        %674 = vmatpush1.bf16.msra.mxu0 0
        %675 = vmatprep.subr.bf16.mxu0 0
        %676 = vmatpush1.bf16.msra.mxu0 0
        %677 = vmatprep.subr.bf16.mxu0 0
        %678 = vmatpush1.bf16.msra.mxu0 0
        %679 = vmatprep.subr.bf16.mxu0 0
        %680 = vmatpush1.bf16.msra.mxu0 %v663
        %681 = vmatprep.subr.bf16.mxu0 0
        %682 = vmatpush2.bf16.msra.mxu0 0
        %683 = vmatprep.subr.bf16.mxu0 0
        %684 = vmatpush2.bf16.msra.mxu0 0
        %685 = vmatprep.subr.bf16.mxu0 0
        %686 = vmatpush2.bf16.msra.mxu0 0
        %687 = vmatprep.subr.bf16.mxu0 0
        %688 = vmatpush2.bf16.msra.mxu0 0
        %689 = vmatprep.subr.bf16.mxu0 0
        %690 = vmatpush2.bf16.msra.mxu0 0
        %691 = vmatprep.subr.bf16.mxu0 0
        %692 = vmatpush2.bf16.msra.mxu0 0
        %693 = vmatprep.subr.bf16.mxu0 0
        %694 = vmatpush2.bf16.msra.mxu0 0
        %695 = vmatprep.subr.bf16.mxu0 0
        %696 = vmatpush2.bf16.msra.mxu0 0
        %697 = vmatprep.mubr.bf16.mxu0 0
        %698 = vmatmul.mubr.bf16.gmra.mxu0 %v660
        %v699 = vpop.f32.mrf.mxu0
        %v700 = vadd.f32 0.0, %v699
        %v701 = vpop.f32.mrf.mxu0
        %v702 = vpop.f32.mrf.mxu0
        %v703 = vpop.f32.mrf.mxu0
        %704 = vdwg.mxu0
        %706 = vrot.lane.b32.xlu0 %v700, 32
        %v707 = vpop.permute.xlu0 %706
        %v709 = vadd.f32 %v652, %v707
        %vm710 = vcmask 392448
        %711 = vst.msk [vmem:[#allocation4] sm:$0xff] %vm710, %v709
        %712 = vst.msk [vmem:[#allocation2] sm:$0xff] %vm644, %v626
        %713 = vrot.lane.b32.xlu0 %v438, 80
        %v714 = vpop.permute.xlu0 %713
        %v716 = vsel %vm305, %v714, 0
        %718 = vmatprep.subr.bf16.mxu0 0
        %719 = vmatpush1.bf16.xpose.msra.mxu0 0
        %720 = vmatprep.subr.bf16.mxu0 0
        %721 = vmatpush1.bf16.xpose.msra.mxu0 0
        %722 = vmatprep.subr.bf16.mxu0 0
        %723 = vmatpush1.bf16.xpose.msra.mxu0 0
        %724 = vmatprep.subr.bf16.mxu0 0
        %725 = vmatpush1.bf16.xpose.msra.mxu0 0
        %726 = vmatprep.subr.bf16.mxu0 0
        %727 = vmatpush1.bf16.xpose.msra.mxu0 0
        %728 = vmatprep.subr.bf16.mxu0 0
        %729 = vmatpush1.bf16.xpose.msra.mxu0 0
        %730 = vmatprep.subr.bf16.mxu0 0
        %731 = vmatpush1.bf16.xpose.msra.mxu0 0
        %732 = vmatprep.subr.bf16.mxu0 0
        %733 = vmatpush1.bf16.xpose.msra.mxu0 %v579
        %734 = vmatprep.subr.bf16.mxu0 0
        %735 = vmatpush2.bf16.xpose.msra.mxu0 0
        %736 = vmatprep.subr.bf16.mxu0 0
        %737 = vmatpush2.bf16.xpose.msra.mxu0 0
        %738 = vmatprep.subr.bf16.mxu0 0
        %739 = vmatpush2.bf16.xpose.msra.mxu0 0
        %740 = vmatprep.subr.bf16.mxu0 0
        %741 = vmatpush2.bf16.xpose.msra.mxu0 0
        %742 = vmatprep.subr.bf16.mxu0 0
        %743 = vmatpush2.bf16.xpose.msra.mxu0 0
        %744 = vmatprep.subr.bf16.mxu0 0
        %745 = vmatpush2.bf16.xpose.msra.mxu0 0
        %746 = vmatprep.subr.bf16.mxu0 0
        %747 = vmatpush2.bf16.xpose.msra.mxu0 0
        %748 = vmatprep.subr.bf16.mxu0 0
        %749 = vmatpush2.bf16.xpose.msra.mxu0 0
        %750 = vmatprep.mubr.bf16.mxu0 0
        %751 = vmatmul.mubr.bf16.gmra.mxu0 %v716
        %v752 = vpop.f32.mrf.mxu0
        %v753 = vadd.f32 0.0, %v752
        %v754 = vpop.f32.mrf.mxu0
        %v755 = vpop.f32.mrf.mxu0
        %v756 = vpop.f32.mrf.mxu0
        %757 = vdwg.mxu0
        %v758 = vmul.f32 %v753, 0.25
        %v759 = vld [vmem:[#allocation2] sm:$0xff]
        %v760 = vsel %vm354, %v758, -inf
        %761 = vmax.xlane.f32.xlu0 %v760
        %v762 = vpop.xlane.xlu0 %761
        %v763 = vmax.f32 %v759, %v762
        %v764 = vsub.f32 %v759, %v763
        %v765 = vmul.f32 %v764, 1.442695
        %v766 = vpow.pop %v765
        %768 = vset.pattern.permute.xlu0 3
        %769 = vperm.xlu0 %768, %v763
        %v770 = vpop.permute.xlu0 %769
        %v772 = vsub.f32 %v758, %v770
        %v773 = vmul.f32 %v772, 1.442695
        %v774 = vpow.pop %v773
        %v775 = vld [vmem:[#allocation3] sm:$0xff]
        %v776 = vmul.f32 %v766, %v775
        %v777 = vsel %vm354, %v774, 0.0
        %778 = vadd.xlane.f32.xlu0 %v777
        %v779 = vpop.xlane.xlu0 %778
        %v780 = vadd.f32 %v776, %v779
        %vm781 = vcmask 31768
        %782 = vst.msk [vmem:[#allocation3] sm:$0xff] %vm781, %v780
        %v783 = vld [vmem:[#allocation4] sm:$0xff]
        %785 = vset.pattern.permute.xlu0 3
        %786 = vperm.xlu0 %785, %v766
        %v787 = vpop.permute.xlu0 %786
        %v789 = vmul.f32 %v787, %v783
        %v790 = vpack.c.bf16 %v774, %v774
        %v792 = vsel %vm354, %v790, 0
        %794 = vmatprep.subr.bf16.mxu0 0
        %795 = vmatpush1.bf16.msra.mxu0 0
        %796 = vmatprep.subr.bf16.mxu0 0
        %797 = vmatpush1.bf16.msra.mxu0 0
        %798 = vmatprep.subr.bf16.mxu0 0
        %799 = vmatpush1.bf16.msra.mxu0 0
        %800 = vmatprep.subr.bf16.mxu0 0
        %801 = vmatpush1.bf16.msra.mxu0 0
        %802 = vmatprep.subr.bf16.mxu0 0
        %803 = vmatpush1.bf16.msra.mxu0 0
        %804 = vmatprep.subr.bf16.mxu0 0
        %805 = vmatpush1.bf16.msra.mxu0 0
        %806 = vmatprep.subr.bf16.mxu0 0
        %807 = vmatpush1.bf16.msra.mxu0 0
        %808 = vmatprep.subr.bf16.mxu0 0
        %809 = vmatpush1.bf16.msra.mxu0 %v663
        %810 = vmatprep.subr.bf16.mxu0 0
        %811 = vmatpush2.bf16.msra.mxu0 0
        %812 = vmatprep.subr.bf16.mxu0 0
        %813 = vmatpush2.bf16.msra.mxu0 0
        %814 = vmatprep.subr.bf16.mxu0 0
        %815 = vmatpush2.bf16.msra.mxu0 0
        %816 = vmatprep.subr.bf16.mxu0 0
        %817 = vmatpush2.bf16.msra.mxu0 0
        %818 = vmatprep.subr.bf16.mxu0 0
        %819 = vmatpush2.bf16.msra.mxu0 0
        %820 = vmatprep.subr.bf16.mxu0 0
        %821 = vmatpush2.bf16.msra.mxu0 0
        %822 = vmatprep.subr.bf16.mxu0 0
        %823 = vmatpush2.bf16.msra.mxu0 0
        %824 = vmatprep.subr.bf16.mxu0 0
        %825 = vmatpush2.bf16.msra.mxu0 0
        %826 = vmatprep.mubr.bf16.mxu0 0
        %827 = vmatmul.mubr.bf16.gmra.mxu0 %v792
        %v828 = vpop.f32.mrf.mxu0
        %v829 = vadd.f32 0.0, %v828
        %v830 = vpop.f32.mrf.mxu0
        %v831 = vpop.f32.mrf.mxu0
        %v832 = vpop.f32.mrf.mxu0
        %833 = vdwg.mxu0
        %835 = vrot.lane.b32.xlu0 %v829, 48
        %v836 = vpop.permute.xlu0 %835
        %v838 = vadd.f32 %v789, %v836
        %vm839 = vcmask 523648
        %840 = vst.msk [vmem:[#allocation4] sm:$0xff] %vm839, %v838
        %841 = vst.msk [vmem:[#allocation2] sm:$0xff] %vm781, %v763
      $region40: #{_lambda_.4} parent=31 // pred_fallthru
        _
      %p842 = scmp.eq.s32.totalorder %s21, %s20
      // Predicated region
      $region41: #{_lambda_.4} parent=31 // pred_check
        %p843 = pneg %p842
      $region42: #{_lambda_.4} parent=31 // pred_check_branch
        %845 = sbr.rel (%p843) target = $region44
      $region43: #{_lambda_.4} parent=31 // pred_region
        %v846 = vld [vmem:[%s258] sm:$0xf]
        %v847 = vld [vmem:[%s267] sm:$0xf]
        %v848 = vld [vmem:[%s278] sm:$0xf]
        %v849 = vlaneseq
        %v850 = vshrl.u32 %v849, 7
        %v851 = vlaneseq
        %v852 = vand.u32 %v851, 127
        %vm853 = vcmask 130048
        %v855 = vsel %vm853, %v846, 0
        %v858 = vsel %vm853, %v847, 0
        %860 = vmatprep.subr.bf16.mxu0 0
        %861 = vmatpush1.bf16.xpose.msra.mxu0 0
        %862 = vmatprep.subr.bf16.mxu0 0
        %863 = vmatpush1.bf16.xpose.msra.mxu0 0
        %864 = vmatprep.subr.bf16.mxu0 0
        %865 = vmatpush1.bf16.xpose.msra.mxu0 0
        %866 = vmatprep.subr.bf16.mxu0 0
        %867 = vmatpush1.bf16.xpose.msra.mxu0 0
        %868 = vmatprep.subr.bf16.mxu0 0
        %869 = vmatpush1.bf16.xpose.msra.mxu0 0
        %870 = vmatprep.subr.bf16.mxu0 0
        %871 = vmatpush1.bf16.xpose.msra.mxu0 0
        %872 = vmatprep.subr.bf16.mxu0 0
        %873 = vmatpush1.bf16.xpose.msra.mxu0 0
        %874 = vmatprep.subr.bf16.mxu0 0
        %875 = vmatpush1.bf16.xpose.msra.mxu0 %v858
        %876 = vmatprep.subr.bf16.mxu0 0
        %877 = vmatpush2.bf16.xpose.msra.mxu0 0
        %878 = vmatprep.subr.bf16.mxu0 0
        %879 = vmatpush2.bf16.xpose.msra.mxu0 0
        %880 = vmatprep.subr.bf16.mxu0 0
        %881 = vmatpush2.bf16.xpose.msra.mxu0 0
        %882 = vmatprep.subr.bf16.mxu0 0
        %883 = vmatpush2.bf16.xpose.msra.mxu0 0
        %884 = vmatprep.subr.bf16.mxu0 0
        %885 = vmatpush2.bf16.xpose.msra.mxu0 0
        %886 = vmatprep.subr.bf16.mxu0 0
        %887 = vmatpush2.bf16.xpose.msra.mxu0 0
        %888 = vmatprep.subr.bf16.mxu0 0
        %889 = vmatpush2.bf16.xpose.msra.mxu0 0
        %890 = vmatprep.subr.bf16.mxu0 0
        %891 = vmatpush2.bf16.xpose.msra.mxu0 0
        %892 = vmatprep.mubr.bf16.mxu0 0
        %893 = vmatmul.mubr.bf16.gmra.mxu0 %v855
        %v894 = vpop.f32.mrf.mxu0
        %v895 = vadd.f32 0.0, %v894
        %v896 = vpop.f32.mrf.mxu0
        %v897 = vpop.f32.mrf.mxu0
        %v898 = vpop.f32.mrf.mxu0
        %899 = vdwg.mxu0
        %v900 = vmul.f32 %v895, 0.25
        %vm901 = vcmp.gt.s32.totalorder %v852, %v850
        %v902 = vsel %vm901, -inf, %v900
        %v903 = vld [vmem:[#allocation2] sm:$0xff]
        %vm904 = vcmask 64512
        %v905 = vsel %vm904, %v902, -inf
        %906 = vmax.xlane.f32.xlu0 %v905
        %v907 = vpop.xlane.xlu0 %906
        %v908 = vmax.f32 %v903, %v907
        %v909 = vsub.f32 %v903, %v908
        %v910 = vmul.f32 %v909, 1.442695
        %v911 = vpow.pop %v910
        %913 = vset.pattern.permute.xlu0 0
        %914 = vperm.xlu0 %913, %v908
        %v915 = vpop.permute.xlu0 %914
        %v917 = vsub.f32 %v902, %v915
        %v918 = vmul.f32 %v917, 1.442695
        %v919 = vpow.pop %v918
        %v920 = vld [vmem:[#allocation3] sm:$0xff]
        %v921 = vmul.f32 %v911, %v920
        %v922 = vsel %vm904, %v919, 0.0
        %923 = vadd.xlane.f32.xlu0 %v922
        %v924 = vpop.xlane.xlu0 %923
        %v925 = vadd.f32 %v921, %v924
        %vm926 = vcmask 7168
        %927 = vst.msk [vmem:[#allocation3] sm:$0xff] %vm926, %v925
        %v928 = vld [vmem:[#allocation4] sm:$0xff]
        %930 = vset.pattern.permute.xlu0 0
        %931 = vperm.xlu0 %930, %v911
        %v932 = vpop.permute.xlu0 %931
        %v934 = vmul.f32 %v932, %v928
        %v935 = vpack.c.bf16 %v919, %v919
        %v937 = vsel %vm904, %v935, 0
        %vm939 = vcmask 1043456
        %v941 = vsel %vm939, %v848, 0
        %943 = vmatprep.subr.bf16.mxu0 0
        %944 = vmatpush1.bf16.msra.mxu0 0
        %945 = vmatprep.subr.bf16.mxu0 0
        %946 = vmatpush1.bf16.msra.mxu0 0
        %947 = vmatprep.subr.bf16.mxu0 0
        %948 = vmatpush1.bf16.msra.mxu0 0
        %949 = vmatprep.subr.bf16.mxu0 0
        %950 = vmatpush1.bf16.msra.mxu0 0
        %951 = vmatprep.subr.bf16.mxu0 0
        %952 = vmatpush1.bf16.msra.mxu0 0
        %953 = vmatprep.subr.bf16.mxu0 0
        %954 = vmatpush1.bf16.msra.mxu0 0
        %955 = vmatprep.subr.bf16.mxu0 0
        %956 = vmatpush1.bf16.msra.mxu0 0
        %957 = vmatprep.subr.bf16.mxu0 0
        %958 = vmatpush1.bf16.msra.mxu0 %v941
        %959 = vmatprep.subr.bf16.mxu0 0
        %960 = vmatpush2.bf16.msra.mxu0 0
        %961 = vmatprep.subr.bf16.mxu0 0
        %962 = vmatpush2.bf16.msra.mxu0 0
        %963 = vmatprep.subr.bf16.mxu0 0
        %964 = vmatpush2.bf16.msra.mxu0 0
        %965 = vmatprep.subr.bf16.mxu0 0
        %966 = vmatpush2.bf16.msra.mxu0 0
        %967 = vmatprep.subr.bf16.mxu0 0
        %968 = vmatpush2.bf16.msra.mxu0 0
        %969 = vmatprep.subr.bf16.mxu0 0
        %970 = vmatpush2.bf16.msra.mxu0 0
        %971 = vmatprep.subr.bf16.mxu0 0
        %972 = vmatpush2.bf16.msra.mxu0 0
        %973 = vmatprep.subr.bf16.mxu0 0
        %974 = vmatpush2.bf16.msra.mxu0 0
        %975 = vmatprep.mubr.bf16.mxu0 0
        %976 = vmatmul.mubr.bf16.gmra.mxu0 %v937
        %v977 = vpop.f32.mrf.mxu0
        %v978 = vadd.f32 0.0, %v977
        %v979 = vpop.f32.mrf.mxu0
        %v980 = vpop.f32.mrf.mxu0
        %v981 = vpop.f32.mrf.mxu0
        %982 = vdwg.mxu0
        %v983 = vadd.f32 %v934, %v978
        %984 = vst.msk [vmem:[#allocation4] sm:$0xff] %vm853, %v983
        %985 = vst.msk [vmem:[#allocation2] sm:$0xff] %vm926, %v908
        %v987 = vunpack.c.l.b16 %v846
        %v988 = vpack.c.b16 %v987, %v987
        %989 = vrot.lane.b32.xlu0 %v988, 112
        %v990 = vpop.permute.xlu0 %989
        %v992 = vsel %vm853, %v990, 0
        %994 = vmatprep.subr.bf16.mxu0 0
        %995 = vmatpush1.bf16.xpose.msra.mxu0 0
        %996 = vmatprep.subr.bf16.mxu0 0
        %997 = vmatpush1.bf16.xpose.msra.mxu0 0
        %998 = vmatprep.subr.bf16.mxu0 0
        %999 = vmatpush1.bf16.xpose.msra.mxu0 0
        %1000 = vmatprep.subr.bf16.mxu0 0
        %1001 = vmatpush1.bf16.xpose.msra.mxu0 0
        %1002 = vmatprep.subr.bf16.mxu0 0
        %1003 = vmatpush1.bf16.xpose.msra.mxu0 0
        %1004 = vmatprep.subr.bf16.mxu0 0
        %1005 = vmatpush1.bf16.xpose.msra.mxu0 0
        %1006 = vmatprep.subr.bf16.mxu0 0
        %1007 = vmatpush1.bf16.xpose.msra.mxu0 0
        %1008 = vmatprep.subr.bf16.mxu0 0
        %1009 = vmatpush1.bf16.xpose.msra.mxu0 %v858
        %1010 = vmatprep.subr.bf16.mxu0 0
        %1011 = vmatpush2.bf16.xpose.msra.mxu0 0
        %1012 = vmatprep.subr.bf16.mxu0 0
        %1013 = vmatpush2.bf16.xpose.msra.mxu0 0
        %1014 = vmatprep.subr.bf16.mxu0 0
        %1015 = vmatpush2.bf16.xpose.msra.mxu0 0
        %1016 = vmatprep.subr.bf16.mxu0 0
        %1017 = vmatpush2.bf16.xpose.msra.mxu0 0
        %1018 = vmatprep.subr.bf16.mxu0 0
        %1019 = vmatpush2.bf16.xpose.msra.mxu0 0
        %1020 = vmatprep.subr.bf16.mxu0 0
        %1021 = vmatpush2.bf16.xpose.msra.mxu0 0
        %1022 = vmatprep.subr.bf16.mxu0 0
        %1023 = vmatpush2.bf16.xpose.msra.mxu0 0
        %1024 = vmatprep.subr.bf16.mxu0 0
        %1025 = vmatpush2.bf16.xpose.msra.mxu0 0
        %1026 = vmatprep.mubr.bf16.mxu0 0
        %1027 = vmatmul.mubr.bf16.gmra.mxu0 %v992
        %v1028 = vpop.f32.mrf.mxu0
        %v1029 = vadd.f32 0.0, %v1028
        %v1030 = vpop.f32.mrf.mxu0
        %v1031 = vpop.f32.mrf.mxu0
        %v1032 = vpop.f32.mrf.mxu0
        %1033 = vdwg.mxu0
        %v1034 = vmul.f32 %v1029, 0.25
        %v1035 = vsel %vm901, -inf, %v1034
        %v1036 = vld [vmem:[#allocation2] sm:$0xff]
        %v1037 = vsel %vm904, %v1035, -inf
        %1038 = vmax.xlane.f32.xlu0 %v1037
        %v1039 = vpop.xlane.xlu0 %1038
        %v1040 = vmax.f32 %v1036, %v1039
        %v1041 = vsub.f32 %v1036, %v1040
        %v1042 = vmul.f32 %v1041, 1.442695
        %v1043 = vpow.pop %v1042
        %1045 = vset.pattern.permute.xlu0 1
        %1046 = vperm.xlu0 %1045, %v1040
        %v1047 = vpop.permute.xlu0 %1046
        %v1049 = vsub.f32 %v1035, %v1047
        %v1050 = vmul.f32 %v1049, 1.442695
        %v1051 = vpow.pop %v1050
        %v1052 = vld [vmem:[#allocation3] sm:$0xff]
        %v1053 = vmul.f32 %v1043, %v1052
        %v1054 = vsel %vm904, %v1051, 0.0
        %1055 = vadd.xlane.f32.xlu0 %v1054
        %v1056 = vpop.xlane.xlu0 %1055
        %v1057 = vadd.f32 %v1053, %v1056
        %vm1058 = vcmask 15368
        %1059 = vst.msk [vmem:[#allocation3] sm:$0xff] %vm1058, %v1057
        %v1060 = vld [vmem:[#allocation4] sm:$0xff]
        %1062 = vset.pattern.permute.xlu0 1
        %1063 = vperm.xlu0 %1062, %v1043
        %v1064 = vpop.permute.xlu0 %1063
        %v1066 = vmul.f32 %v1064, %v1060
        %v1067 = vpack.c.bf16 %v1051, %v1051
        %v1069 = vsel %vm904, %v1067, 0
        %1071 = vmatprep.subr.bf16.mxu0 0
        %1072 = vmatpush1.bf16.msra.mxu0 0
        %1073 = vmatprep.subr.bf16.mxu0 0
        %1074 = vmatpush1.bf16.msra.mxu0 0
        %1075 = vmatprep.subr.bf16.mxu0 0
        %1076 = vmatpush1.bf16.msra.mxu0 0
        %1077 = vmatprep.subr.bf16.mxu0 0
        %1078 = vmatpush1.bf16.msra.mxu0 0
        %1079 = vmatprep.subr.bf16.mxu0 0
        %1080 = vmatpush1.bf16.msra.mxu0 0
        %1081 = vmatprep.subr.bf16.mxu0 0
        %1082 = vmatpush1.bf16.msra.mxu0 0
        %1083 = vmatprep.subr.bf16.mxu0 0
        %1084 = vmatpush1.bf16.msra.mxu0 0
        %1085 = vmatprep.subr.bf16.mxu0 0
        %1086 = vmatpush1.bf16.msra.mxu0 %v941
        %1087 = vmatprep.subr.bf16.mxu0 0
        %1088 = vmatpush2.bf16.msra.mxu0 0
        %1089 = vmatprep.subr.bf16.mxu0 0
        %1090 = vmatpush2.bf16.msra.mxu0 0
        %1091 = vmatprep.subr.bf16.mxu0 0
        %1092 = vmatpush2.bf16.msra.mxu0 0
        %1093 = vmatprep.subr.bf16.mxu0 0
        %1094 = vmatpush2.bf16.msra.mxu0 0
        %1095 = vmatprep.subr.bf16.mxu0 0
        %1096 = vmatpush2.bf16.msra.mxu0 0
        %1097 = vmatprep.subr.bf16.mxu0 0
        %1098 = vmatpush2.bf16.msra.mxu0 0
        %1099 = vmatprep.subr.bf16.mxu0 0
        %1100 = vmatpush2.bf16.msra.mxu0 0
        %1101 = vmatprep.subr.bf16.mxu0 0
        %1102 = vmatpush2.bf16.msra.mxu0 0
        %1103 = vmatprep.mubr.bf16.mxu0 0
        %1104 = vmatmul.mubr.bf16.gmra.mxu0 %v1069
        %v1105 = vpop.f32.mrf.mxu0
        %v1106 = vadd.f32 0.0, %v1105
        %v1107 = vpop.f32.mrf.mxu0
        %v1108 = vpop.f32.mrf.mxu0
        %v1109 = vpop.f32.mrf.mxu0
        %1110 = vdwg.mxu0
        %1112 = vrot.lane.b32.xlu0 %v1106, 16
        %v1113 = vpop.permute.xlu0 %1112
        %v1115 = vadd.f32 %v1066, %v1113
        %vm1116 = vcmask 261248
        %1117 = vst.msk [vmem:[#allocation4] sm:$0xff] %vm1116, %v1115
        %1118 = vst.msk [vmem:[#allocation2] sm:$0xff] %vm1058, %v1040
        %1119 = vrot.lane.b32.xlu0 %v988, 96
        %v1120 = vpop.permute.xlu0 %1119
        %v1122 = vunpack.c.l.b16 %v847
        %v1123 = vpack.c.b16 %v1122, %v1122
        %1124 = vrot.lane.b32.xlu0 %v1123, 112
        %v1125 = vpop.permute.xlu0 %1124
        %v1127 = vsel %vm853, %v1120, 0
        %v1130 = vsel %vm853, %v1125, 0
        %1132 = vmatprep.subr.bf16.mxu0 0
        %1133 = vmatpush1.bf16.xpose.msra.mxu0 0
        %1134 = vmatprep.subr.bf16.mxu0 0
        %1135 = vmatpush1.bf16.xpose.msra.mxu0 0
        %1136 = vmatprep.subr.bf16.mxu0 0
        %1137 = vmatpush1.bf16.xpose.msra.mxu0 0
        %1138 = vmatprep.subr.bf16.mxu0 0
        %1139 = vmatpush1.bf16.xpose.msra.mxu0 0
        %1140 = vmatprep.subr.bf16.mxu0 0
        %1141 = vmatpush1.bf16.xpose.msra.mxu0 0
        %1142 = vmatprep.subr.bf16.mxu0 0
        %1143 = vmatpush1.bf16.xpose.msra.mxu0 0
        %1144 = vmatprep.subr.bf16.mxu0 0
        %1145 = vmatpush1.bf16.xpose.msra.mxu0 0
        %1146 = vmatprep.subr.bf16.mxu0 0
        %1147 = vmatpush1.bf16.xpose.msra.mxu0 %v1130
        %1148 = vmatprep.subr.bf16.mxu0 0
        %1149 = vmatpush2.bf16.xpose.msra.mxu0 0
        %1150 = vmatprep.subr.bf16.mxu0 0
        %1151 = vmatpush2.bf16.xpose.msra.mxu0 0
        %1152 = vmatprep.subr.bf16.mxu0 0
        %1153 = vmatpush2.bf16.xpose.msra.mxu0 0
        %1154 = vmatprep.subr.bf16.mxu0 0
        %1155 = vmatpush2.bf16.xpose.msra.mxu0 0
        %1156 = vmatprep.subr.bf16.mxu0 0
        %1157 = vmatpush2.bf16.xpose.msra.mxu0 0
        %1158 = vmatprep.subr.bf16.mxu0 0
        %1159 = vmatpush2.bf16.xpose.msra.mxu0 0
        %1160 = vmatprep.subr.bf16.mxu0 0
        %1161 = vmatpush2.bf16.xpose.msra.mxu0 0
        %1162 = vmatprep.subr.bf16.mxu0 0
        %1163 = vmatpush2.bf16.xpose.msra.mxu0 0
        %1164 = vmatprep.mubr.bf16.mxu0 0
        %1165 = vmatmul.mubr.bf16.gmra.mxu0 %v1127
        %v1166 = vpop.f32.mrf.mxu0
        %v1167 = vadd.f32 0.0, %v1166
        %v1168 = vpop.f32.mrf.mxu0
        %v1169 = vpop.f32.mrf.mxu0
        %v1170 = vpop.f32.mrf.mxu0
        %1171 = vdwg.mxu0
        %v1172 = vmul.f32 %v1167, 0.25
        %v1173 = vsel %vm901, -inf, %v1172
        %v1174 = vld [vmem:[#allocation2] sm:$0xff]
        %v1175 = vsel %vm904, %v1173, -inf
        %1176 = vmax.xlane.f32.xlu0 %v1175
        %v1177 = vpop.xlane.xlu0 %1176
        %v1178 = vmax.f32 %v1174, %v1177
        %v1179 = vsub.f32 %v1174, %v1178
        %v1180 = vmul.f32 %v1179, 1.442695
        %v1181 = vpow.pop %v1180
        %1183 = vset.pattern.permute.xlu0 2
        %1184 = vperm.xlu0 %1183, %v1178
        %v1185 = vpop.permute.xlu0 %1184
        %v1187 = vsub.f32 %v1173, %v1185
        %v1188 = vmul.f32 %v1187, 1.442695
        %v1189 = vpow.pop %v1188
        %v1190 = vld [vmem:[#allocation3] sm:$0xff]
        %v1191 = vmul.f32 %v1181, %v1190
        %v1192 = vsel %vm904, %v1189, 0.0
        %1193 = vadd.xlane.f32.xlu0 %v1192
        %v1194 = vpop.xlane.xlu0 %1193
        %v1195 = vadd.f32 %v1191, %v1194
        %vm1196 = vcmask 23568
        %1197 = vst.msk [vmem:[#allocation3] sm:$0xff] %vm1196, %v1195
        %v1198 = vld [vmem:[#allocation4] sm:$0xff]
        %1200 = vset.pattern.permute.xlu0 2
        %1201 = vperm.xlu0 %1200, %v1181
        %v1202 = vpop.permute.xlu0 %1201
        %v1204 = vmul.f32 %v1202, %v1198
        %v1205 = vpack.c.bf16 %v1189, %v1189
        %v1207 = vunpack.c.l.b16 %v848
        %v1208 = vpack.c.b16 %v1207, %v1207
        %1209 = vrot.lane.b32.xlu0 %v1208, 112
        %v1210 = vpop.permute.xlu0 %1209
        %v1212 = vsel %vm904, %v1205, 0
        %v1215 = vsel %vm939, %v1210, 0
        %1217 = vmatprep.subr.bf16.mxu0 0
        %1218 = vmatpush1.bf16.msra.mxu0 0
        %1219 = vmatprep.subr.bf16.mxu0 0
        %1220 = vmatpush1.bf16.msra.mxu0 0
        %1221 = vmatprep.subr.bf16.mxu0 0
        %1222 = vmatpush1.bf16.msra.mxu0 0
        %1223 = vmatprep.subr.bf16.mxu0 0
        %1224 = vmatpush1.bf16.msra.mxu0 0
        %1225 = vmatprep.subr.bf16.mxu0 0
        %1226 = vmatpush1.bf16.msra.mxu0 0
        %1227 = vmatprep.subr.bf16.mxu0 0
        %1228 = vmatpush1.bf16.msra.mxu0 0
        %1229 = vmatprep.subr.bf16.mxu0 0
        %1230 = vmatpush1.bf16.msra.mxu0 0
        %1231 = vmatprep.subr.bf16.mxu0 0
        %1232 = vmatpush1.bf16.msra.mxu0 %v1215
        %1233 = vmatprep.subr.bf16.mxu0 0
        %1234 = vmatpush2.bf16.msra.mxu0 0
        %1235 = vmatprep.subr.bf16.mxu0 0
        %1236 = vmatpush2.bf16.msra.mxu0 0
        %1237 = vmatprep.subr.bf16.mxu0 0
        %1238 = vmatpush2.bf16.msra.mxu0 0
        %1239 = vmatprep.subr.bf16.mxu0 0
        %1240 = vmatpush2.bf16.msra.mxu0 0
        %1241 = vmatprep.subr.bf16.mxu0 0
        %1242 = vmatpush2.bf16.msra.mxu0 0
        %1243 = vmatprep.subr.bf16.mxu0 0
        %1244 = vmatpush2.bf16.msra.mxu0 0
        %1245 = vmatprep.subr.bf16.mxu0 0
        %1246 = vmatpush2.bf16.msra.mxu0 0
        %1247 = vmatprep.subr.bf16.mxu0 0
        %1248 = vmatpush2.bf16.msra.mxu0 0
        %1249 = vmatprep.mubr.bf16.mxu0 0
        %1250 = vmatmul.mubr.bf16.gmra.mxu0 %v1212
        %v1251 = vpop.f32.mrf.mxu0
        %v1252 = vadd.f32 0.0, %v1251
        %v1253 = vpop.f32.mrf.mxu0
        %v1254 = vpop.f32.mrf.mxu0
        %v1255 = vpop.f32.mrf.mxu0
        %1256 = vdwg.mxu0
        %1258 = vrot.lane.b32.xlu0 %v1252, 32
        %v1259 = vpop.permute.xlu0 %1258
        %v1261 = vadd.f32 %v1204, %v1259
        %vm1262 = vcmask 392448
        %1263 = vst.msk [vmem:[#allocation4] sm:$0xff] %vm1262, %v1261
        %1264 = vst.msk [vmem:[#allocation2] sm:$0xff] %vm1196, %v1178
        %1265 = vrot.lane.b32.xlu0 %v988, 80
        %v1266 = vpop.permute.xlu0 %1265
        %v1268 = vsel %vm853, %v1266, 0
        %1270 = vmatprep.subr.bf16.mxu0 0
        %1271 = vmatpush1.bf16.xpose.msra.mxu0 0
        %1272 = vmatprep.subr.bf16.mxu0 0
        %1273 = vmatpush1.bf16.xpose.msra.mxu0 0
        %1274 = vmatprep.subr.bf16.mxu0 0
        %1275 = vmatpush1.bf16.xpose.msra.mxu0 0
        %1276 = vmatprep.subr.bf16.mxu0 0
        %1277 = vmatpush1.bf16.xpose.msra.mxu0 0
        %1278 = vmatprep.subr.bf16.mxu0 0
        %1279 = vmatpush1.bf16.xpose.msra.mxu0 0
        %1280 = vmatprep.subr.bf16.mxu0 0
        %1281 = vmatpush1.bf16.xpose.msra.mxu0 0
        %1282 = vmatprep.subr.bf16.mxu0 0
        %1283 = vmatpush1.bf16.xpose.msra.mxu0 0
        %1284 = vmatprep.subr.bf16.mxu0 0
        %1285 = vmatpush1.bf16.xpose.msra.mxu0 %v1130
        %1286 = vmatprep.subr.bf16.mxu0 0
        %1287 = vmatpush2.bf16.xpose.msra.mxu0 0
        %1288 = vmatprep.subr.bf16.mxu0 0
        %1289 = vmatpush2.bf16.xpose.msra.mxu0 0
        %1290 = vmatprep.subr.bf16.mxu0 0
        %1291 = vmatpush2.bf16.xpose.msra.mxu0 0
        %1292 = vmatprep.subr.bf16.mxu0 0
        %1293 = vmatpush2.bf16.xpose.msra.mxu0 0
        %1294 = vmatprep.subr.bf16.mxu0 0
        %1295 = vmatpush2.bf16.xpose.msra.mxu0 0
        %1296 = vmatprep.subr.bf16.mxu0 0
        %1297 = vmatpush2.bf16.xpose.msra.mxu0 0
        %1298 = vmatprep.subr.bf16.mxu0 0
        %1299 = vmatpush2.bf16.xpose.msra.mxu0 0
        %1300 = vmatprep.subr.bf16.mxu0 0
        %1301 = vmatpush2.bf16.xpose.msra.mxu0 0
        %1302 = vmatprep.mubr.bf16.mxu0 0
        %1303 = vmatmul.mubr.bf16.gmra.mxu0 %v1268
        %v1304 = vpop.f32.mrf.mxu0
        %v1305 = vadd.f32 0.0, %v1304
        %v1306 = vpop.f32.mrf.mxu0
        %v1307 = vpop.f32.mrf.mxu0
        %v1308 = vpop.f32.mrf.mxu0
        %1309 = vdwg.mxu0
        %v1310 = vmul.f32 %v1305, 0.25
        %v1311 = vsel %vm901, -inf, %v1310
        %v1312 = vld [vmem:[#allocation2] sm:$0xff]
        %v1313 = vsel %vm904, %v1311, -inf
        %1314 = vmax.xlane.f32.xlu0 %v1313
        %v1315 = vpop.xlane.xlu0 %1314
        %v1316 = vmax.f32 %v1312, %v1315
        %v1317 = vsub.f32 %v1312, %v1316
        %v1318 = vmul.f32 %v1317, 1.442695
        %v1319 = vpow.pop %v1318
        %1321 = vset.pattern.permute.xlu0 3
        %1322 = vperm.xlu0 %1321, %v1316
        %v1323 = vpop.permute.xlu0 %1322
        %v1325 = vsub.f32 %v1311, %v1323
        %v1326 = vmul.f32 %v1325, 1.442695
        %v1327 = vpow.pop %v1326
        %v1328 = vld [vmem:[#allocation3] sm:$0xff]
        %v1329 = vmul.f32 %v1319, %v1328
        %v1330 = vsel %vm904, %v1327, 0.0
        %1331 = vadd.xlane.f32.xlu0 %v1330
        %v1332 = vpop.xlane.xlu0 %1331
        %v1333 = vadd.f32 %v1329, %v1332
        %vm1334 = vcmask 31768
        %1335 = vst.msk [vmem:[#allocation3] sm:$0xff] %vm1334, %v1333
        %v1336 = vld [vmem:[#allocation4] sm:$0xff]
        %1338 = vset.pattern.permute.xlu0 3
        %1339 = vperm.xlu0 %1338, %v1319
        %v1340 = vpop.permute.xlu0 %1339
        %v1342 = vmul.f32 %v1340, %v1336
        %v1343 = vpack.c.bf16 %v1327, %v1327
        %v1345 = vsel %vm904, %v1343, 0
        %1347 = vmatprep.subr.bf16.mxu0 0
        %1348 = vmatpush1.bf16.msra.mxu0 0
        %1349 = vmatprep.subr.bf16.mxu0 0
        %1350 = vmatpush1.bf16.msra.mxu0 0
        %1351 = vmatprep.subr.bf16.mxu0 0
        %1352 = vmatpush1.bf16.msra.mxu0 0
        %1353 = vmatprep.subr.bf16.mxu0 0
        %1354 = vmatpush1.bf16.msra.mxu0 0
        %1355 = vmatprep.subr.bf16.mxu0 0
        %1356 = vmatpush1.bf16.msra.mxu0 0
        %1357 = vmatprep.subr.bf16.mxu0 0
        %1358 = vmatpush1.bf16.msra.mxu0 0
        %1359 = vmatprep.subr.bf16.mxu0 0
        %1360 = vmatpush1.bf16.msra.mxu0 0
        %1361 = vmatprep.subr.bf16.mxu0 0
        %1362 = vmatpush1.bf16.msra.mxu0 %v1215
        %1363 = vmatprep.subr.bf16.mxu0 0
        %1364 = vmatpush2.bf16.msra.mxu0 0
        %1365 = vmatprep.subr.bf16.mxu0 0
        %1366 = vmatpush2.bf16.msra.mxu0 0
        %1367 = vmatprep.subr.bf16.mxu0 0
        %1368 = vmatpush2.bf16.msra.mxu0 0
        %1369 = vmatprep.subr.bf16.mxu0 0
        %1370 = vmatpush2.bf16.msra.mxu0 0
        %1371 = vmatprep.subr.bf16.mxu0 0
        %1372 = vmatpush2.bf16.msra.mxu0 0
        %1373 = vmatprep.subr.bf16.mxu0 0
        %1374 = vmatpush2.bf16.msra.mxu0 0
        %1375 = vmatprep.subr.bf16.mxu0 0
        %1376 = vmatpush2.bf16.msra.mxu0 0
        %1377 = vmatprep.subr.bf16.mxu0 0
        %1378 = vmatpush2.bf16.msra.mxu0 0
        %1379 = vmatprep.mubr.bf16.mxu0 0
        %1380 = vmatmul.mubr.bf16.gmra.mxu0 %v1345
        %v1381 = vpop.f32.mrf.mxu0
        %v1382 = vadd.f32 0.0, %v1381
        %v1383 = vpop.f32.mrf.mxu0
        %v1384 = vpop.f32.mrf.mxu0
        %v1385 = vpop.f32.mrf.mxu0
        %1386 = vdwg.mxu0
        %1388 = vrot.lane.b32.xlu0 %v1382, 48
        %v1389 = vpop.permute.xlu0 %1388
        %v1391 = vadd.f32 %v1342, %v1389
        %vm1392 = vcmask 523648
        %1393 = vst.msk [vmem:[#allocation4] sm:$0xff] %vm1392, %v1391
        %1394 = vst.msk [vmem:[#allocation2] sm:$0xff] %vm1334, %v1316
        %v1395 = vld [vmem:[#allocation3] sm:$0xff]
        %v1396 = vrcp.pop %v1395
        %v1397 = vld [vmem:[#allocation4] sm:$0xff]
        %1399 = vset.pattern.permute.xlu0 0
        %1400 = vperm.xlu0 %1399, %v1396
        %v1401 = vpop.permute.xlu0 %1400
        %v1403 = vmul.f32 %v1397, %v1401
        %v1404 = vpack.c.bf16 %v1403, %v1403
        %vm1405 = vcmask 125952
        %1406 = vst.msk [vmem:[%s287] sm:$0xf] %vm1405, %v1404
        %v1407 = vld [vmem:[#allocation3] sm:$0xff]
        %v1408 = vrcp.pop %v1407
        %v1409 = vld [vmem:[#allocation4] sm:$0xff]
        %1411 = vset.pattern.permute.xlu0 1
        %1412 = vperm.xlu0 %1411, %v1408
        %v1413 = vpop.permute.xlu0 %1412
        %v1415 = vmul.f32 %v1409, %v1413
        %v1416 = vpack.c.bf16 %v1415, %v1415
        %vm1417 = vcmask 257152
        %1418 = vst.msk [vmem:[%s287] sm:$0xf] %vm1417, %v1416
        %v1419 = vld [vmem:[#allocation3] sm:$0xff]
        %v1420 = vrcp.pop %v1419
        %v1421 = vld [vmem:[#allocation4] sm:$0xff]
        %1423 = vset.pattern.permute.xlu0 2
        %1424 = vperm.xlu0 %1423, %v1420
        %v1425 = vpop.permute.xlu0 %1424
        %v1427 = vmul.f32 %v1421, %v1425
        %v1428 = vpack.c.bf16 %v1427, %v1427
        %vm1429 = vcmask 388352
        %1430 = vst.msk [vmem:[%s287] sm:$0xf] %vm1429, %v1428
        %v1431 = vld [vmem:[#allocation3] sm:$0xff]
        %v1432 = vrcp.pop %v1431
        %v1433 = vld [vmem:[#allocation4] sm:$0xff]
        %1435 = vset.pattern.permute.xlu0 3
        %1436 = vperm.xlu0 %1435, %v1432
        %v1437 = vpop.permute.xlu0 %1436
        %v1439 = vmul.f32 %v1433, %v1437
        %v1440 = vpack.c.bf16 %v1439, %v1439
        %vm1441 = vcmask 519552
        %1442 = vst.msk [vmem:[%s287] sm:$0xf] %vm1441, %v1440
      $region44: #{_lambda_.4} parent=31 // pred_fallthru
        _
      %p1443 = scmp.lt.s32.totalorder %s19, 1
      %s1444 = scalar_select %p1443, %s19, 1
      %p1445 = scmp.lt.s32.totalorder %s20, 0
      %s1446 = scalar_select %p1445, %s20, 0
      %s1447 = sadd.s32 %s1446, %s1444
      %s1448 = smul.addr %s1447, 4
      %s1449 = scalar_lea.vmem %s3, %s1448
      // Predicated region
      $region45: #{_lambda_.4} parent=31 // pred_check
        %p1450 = pneg %p145
      $region46: #{_lambda_.4} parent=31 // pred_check_branch
        %1452 = sbr.rel (%p1450) target = $region48
      $region47: #{_lambda_.4} parent=31 // pred_region
        _
      $region48: #{_lambda_.4} parent=31 // pred_fallthru
        _
    $region32: #{_lambda_.4} parent=5 // pred_fallthru
      _
    %p1453 = scmp.le.s32.totalorder 2, %s9
    // Predicated region
    $region49: #{_lambda_.4} parent=5 // pred_check
      %p1454 = pneg %p1453
    $region50: #{_lambda_.4} parent=5 // pred_check_branch
      %1456 = sbr.rel (%p1454) target = $region52
    $region51: #{_lambda_.4} parent=5 // pred_region
      %s1457 = ssub.s32 %s9, 2
      // Predicated region
      $region53: #{_lambda_.4} parent=51 // pred_check
        %p1458 = pneg %p151
      $region54: #{_lambda_.4} parent=51 // pred_check_branch
        %1460 = sbr.rel (%p1458) target = $region56
      $region55: #{_lambda_.4} parent=51 // pred_region
        %p1461 = scmp.lt.s32.totalorder %s22, 1
        %s1462 = scalar_select %p1461, %s22, 1
        %p1463 = scmp.lt.s32.totalorder %s23, 0
        %s1464 = scalar_select %p1463, %s23, 0
        %s1465 = sadd.s32 %s1464, %s1462
        %s1466 = smul.addr %s1465, 4
        %s1467 = scalar_lea.vmem %s3, %s1466
      $region56: #{_lambda_.4} parent=51 // pred_fallthru
        _
    $region52: #{_lambda_.4} parent=5 // pred_fallthru
      _
  $region6: #{_lambda_.4} parent=0 // loop_footer
    %s13 = sadd.s32 1, %s9
  $region7: #{_lambda_.4} parent=0 // loop_footer_branch
    %8 = sbr.rel target = $region3
  $region8: #{_lambda_.4} parent=0 // loop_exit
    _

</llo_original>
